<compile_context>
chip_gen: v7x
topology: tpu7x:2x2x1
jax: 0.10.0
libtpu: 0.0.40
codegen_flags: <defaults>
</compile_context>

<pallas_src>
import jax
import jax.numpy as jnp
from jax.experimental import pallas as pl
from jax.experimental.pallas import tpu as pltpu


INNER_DIM = 40
_INNER_PAD = 128        # pad inner dim to a full lane width
_X_BLOCK_BYTES = 5 << 20  # ~5 MiB of x per block (tm=1024 @ d=1280, 2048 @ d<=640)
_TM_MAX = 2048
_TM_MIN = 256
_SUB = 256              # in-kernel sub-tile rows (keeps h in the vreg file)


# --------------------------- device introspection -------------------------- #
def _device_kind():
    try:
        return jax.devices()[0].device_kind.lower()
    except Exception:
        return ""


_KIND = _device_kind()
_IS_V5 = "v5" in _KIND
_IS_V6 = "v6" in _KIND
# v7x (and v4-class megacore) have >1 TensorCore; v5e/v6e have one.
_MULTI_TC = not (_IS_V5 or _IS_V6)
# bf16 MXU operands on v5e / v7x (and unknown/newer); keep f32 on v6e.
_USE_BF16 = not _IS_V6


def _vmem_limit_bytes():
    if _IS_V5 or _IS_V6:
        return 100 << 20     # 128 MiB physical VMEM on v5e / v6e
    return 48 << 20          # v7x: 64 MiB physical per TC -> leave headroom


# ------------------------------- helpers ---------------------------------- #
def _round_up(x, n):
    return (x + n - 1) // n * n


def _pick_tm(m, d):
    """Row tile: ~5 MiB of x per block (multiple of 8), capped at 2048.
    Small problems (m <= cap) run in one grid step on single-TC chips; on
    multi-TC chips we split into two blocks so both cores get work."""
    cap = (_X_BLOCK_BYTES // (4 * d)) // 8 * 8
    cap = max(_TM_MIN, min(_TM_MAX, cap))
    if m > cap:
        return cap
    if _MULTI_TC and m >= 512:
        return _round_up(-(-m // 2), 8)     # cdiv(m, 2) rounded to sublane
    return m                                # full-extent block (grid = 1)


def _pick_sub(tm):
    """In-kernel sub-tile rows; None -> single pass over the whole block."""
    if tm > _SUB and tm % _SUB == 0:
        return _SUB
    return None


# ----------------------------- Pallas kernel ------------------------------ #
def _make_kernel(tm, sub, compute_dtype):
    n_sub = 1 if sub is None else tm // sub
    sub = tm if sub is None else sub

    def kernel(x_ref, w_in_ref, w_out_ref, b_ref, o_ref):
        # x_ref:    (tm, d)          VMEM tile of input rows (f32)
        # w_in_ref: (d, inner_pad)   resident weight (inner padded to 128)
        # w_out_ref:(inner_pad, d)   resident weight
        # b_ref:    (1, d)           fused bias (b_in @ W_out + b_out), f32
        # o_ref:    (tm, d)
        w_in = w_in_ref[...]
        w_out = w_out_ref[...]
        bias = b_ref[...]
        # Fully-unrolled sub-tiling with static slice offsets: keeps the f32
        # intermediate at (sub, 128) so it lives in vregs, and lets the LLO
        # scheduler overlap MXU pushes with the previous sub-tile's stores.
        for s in range(n_sub):
            lo, hi = s * sub, (s + 1) * sub
            xs = x_ref[lo:hi, :].astype(compute_dtype)
            h = jnp.dot(xs, w_in, preferred_element_type=jnp.float32)
            y = jnp.dot(h.astype(compute_dtype), w_out,
                        preferred_element_type=jnp.float32) + bias
            o_ref[lo:hi, :] = y.astype(o_ref.dtype)

    return kernel


def single_conv2d_forward(x, w_in, b_in, w_out, b_out):
    """x: (b, pix_num, d) float32.  Returns (b, pix_num, d)."""
    b, pix_num, d = x.shape
    inner = w_in.shape[1]
    m = b * pix_num

    # Fold first bias into one output bias:
    #   (x Wi + bi) Wo + bo = x Wi Wo + (bi Wo + bo)   (exact)
    b_fused = (b_in.astype(jnp.float32) @ w_out.astype(jnp.float32)
               + b_out.astype(jnp.float32)).reshape(1, d)

    # Zero-pad inner dim (40 -> 128): lane-dense intermediate, full MXU tiles.
    inner_pad = _round_up(max(inner, _INNER_PAD), 128)
    if inner_pad != inner:
        w_in_p = jnp.pad(w_in, ((0, 0), (0, inner_pad - inner)))
        w_out_p = jnp.pad(w_out, ((0, inner_pad - inner), (0, 0)))
    else:
        w_in_p, w_out_p = w_in, w_out

    compute_dtype = jnp.bfloat16 if _USE_BF16 else jnp.float32
    wbytes = 2 if _USE_BF16 else 4
    w_in_p = w_in_p.astype(compute_dtype)
    w_out_p = w_out_p.astype(compute_dtype)

    # Row tiling: cdiv grid, Pallas masks the partial edge block (no host pad,
    # no output slice -> no extra HBM copies around the custom call).
    tm = _pick_tm(m, d)
    sub = _pick_sub(tm)
    grid = (pl.cdiv(m, tm),)

    x2 = x.reshape(m, d)

    cost = pl.CostEstimate(
        flops=4 * m * d * inner_pad,                        # two skinny matmuls
        transcendentals=0,
        bytes_accessed=4 * 2 * m * d + wbytes * 2 * d * inner_pad + 4 * d,
    )

    out = pl.pallas_call(
        _make_kernel(tm, sub, compute_dtype),
        out_shape=jax.ShapeDtypeStruct((m, d), x.dtype),
        grid_spec=pltpu.PrefetchScalarGridSpec(
            num_scalar_prefetch=0,
            grid=grid,
            in_specs=[
                pl.BlockSpec((tm, d), lambda i: (i, 0)),          # x rows
                pl.BlockSpec((d, inner_pad), lambda i: (0, 0)),   # W_in (resident)
                pl.BlockSpec((inner_pad, d), lambda i: (0, 0)),   # W_out (resident)
                pl.BlockSpec((1, d), lambda i: (0, 0)),           # fused bias
            ],
            out_specs=pl.BlockSpec((tm, d), lambda i: (i, 0)),
        ),
        compiler_params=pltpu.CompilerParams(
            dimension_semantics=("parallel",),
            vmem_limit_bytes=_vmem_limit_bytes(),
        ),
        cost_estimate=cost,
    )(x2, w_in_p, w_out_p, b_fused)

    return out.reshape(b, pix_num, d)


# ------------------------------ Module glue ------------------------------- #
LAYER_NAMES_RES_DIM = {
    'down_blocks_0_attentions_0_transformer_blocks_0_attn2': (64, 320),
    'down_blocks_0_attentions_1_transformer_blocks_0_attn2': (64, 320),
    'down_blocks_1_attentions_0_transformer_blocks_0_attn2': (32, 640),
    'down_blocks_1_attentions_1_transformer_blocks_0_attn2': (32, 640),
    'down_blocks_2_attentions_0_transformer_blocks_0_attn2': (16, 1280),
    'down_blocks_2_attentions_1_transformer_blocks_0_attn2': (16, 1280),
    'mid_block_attentions_0_transformer_blocks_0_attn2': (8, 1280),
    'up_blocks_1_attentions_0_transformer_blocks_0_attn2': (16, 1280),
    'up_blocks_1_attentions_1_transformer_blocks_0_attn2': (16, 1280),
    'up_blocks_1_attentions_2_transformer_blocks_0_attn2': (16, 1280),
    'up_blocks_2_attentions_0_transformer_blocks_0_attn2': (32, 640),
    'up_blocks_2_attentions_1_transformer_blocks_0_attn2': (32, 640),
    'up_blocks_2_attentions_2_transformer_blocks_0_attn2': (32, 640),
    'up_blocks_3_attentions_0_transformer_blocks_0_attn2': (64, 320),
    'up_blocks_3_attentions_1_transformer_blocks_0_attn2': (64, 320),
    'up_blocks_3_attentions_2_transformer_blocks_0_attn2': (64, 320),
}


def init_single_conv2d_params(key, channel, inner_dim=INNER_DIM):
    """Deterministic init mirroring nn.Linear default (U[-1/sqrt(fan_in), ...])."""
    k1, k2, k3, k4 = jax.random.split(key, 4)
    lim_in = 1.0 / (channel ** 0.5)
    lim_out = 1.0 / (inner_dim ** 0.5)
    # Stored transposed relative to PyTorch (so kernel does x @ W directly).
    w_in = jax.random.uniform(k1, (channel, inner_dim), jnp.float32,
                              -lim_in, lim_in)
    b_in = jax.random.uniform(k2, (inner_dim,), jnp.float32, -lim_in, lim_in)
    w_out = jax.random.uniform(k3, (inner_dim, channel), jnp.float32,
                               -lim_out, lim_out)
    b_out = jax.random.uniform(k4, (channel,), jnp.float32, -lim_out, lim_out)
    return w_in, b_in, w_out, b_out


def init_all_conv2d_params(base_key):
    params = {}
    for idx, name in enumerate(sorted(LAYER_NAMES_RES_DIM.keys())):
        _, dim = LAYER_NAMES_RES_DIM[name]
        params[name] = init_single_conv2d_params(
            jax.random.fold_in(base_key, idx), dim)
    return params


def all_conv2d_forward(params, x, layer_name):
    """AllConv2d.forward: dispatch to per-layer SingleConv2d or identity."""
    if layer_name in LAYER_NAMES_RES_DIM:
        w_in, b_in, w_out, b_out = params[layer_name]
        return single_conv2d_forward(x, w_in, b_in, w_out, b_out)
    return x


# --------------------------------- main ----------------------------------- #
if __name__ == "__main__":
    key = jax.random.PRNGKey(0)
    params = init_all_conv2d_params(jax.random.fold_in(key, 1234))

    # bf16 MXU operands (v5e / v7x) change rounding; relax tolerance there.
    tol = 5e-2 if _USE_BF16 else 1e-4

    # Case 1: mid-block layer, res=8, dim=1280 -> x: (2, 64, 1280); single block.
    layer_name = 'mid_block_attentions_0_transformer_blocks_0_attn2'
    res, dim = LAYER_NAMES_RES_DIM[layer_name]
    b, pix_num = 2, res * res
    x = jax.random.normal(jax.random.fold_in(key, 7), (b, pix_num, dim),
                          jnp.float32)
    out = jax.block_until_ready(all_conv2d_forward(params, x, layer_name))
    w_in, b_in, w_out, b_out = params[layer_name]
    ref = (x @ w_in + b_in) @ w_out + b_out
    assert out.shape == x.shape
    assert jnp.allclose(out, ref, atol=tol, rtol=tol)

    # Case 2: d=320 layer with a ragged row count (full-extent single block).
    layer_name2 = 'down_blocks_0_attentions_0_transformer_blocks_0_attn2'
    x2 = jax.random.normal(jax.random.fold_in(key, 11), (2, 50, 320),
                           jnp.float32)
    out2 = jax.block_until_ready(all_conv2d_forward(params, x2, layer_name2))
    w_in2, b_in2, w_out2, b_out2 = params[layer_name2]
    ref2 = (x2 @ w_in2 + b_in2) @ w_out2 + b_out2
    assert out2.shape == x2.shape
    assert jnp.allclose(out2, ref2, atol=tol, rtol=tol)

    # Case 3: d=320 layer with many rows (multi-step grid, 256-row sub-tiles,
    # masked partial edge block — exercises the cdiv-grid path).
    x3 = jax.random.normal(jax.random.fold_in(key, 13), (2, 4000, 320),
                           jnp.float32)
    out3 = jax.block_until_ready(all_conv2d_forward(params, x3, layer_name2))
    ref3 = (x3 @ w_in2 + b_in2) @ w_out2 + b_out2
    assert out3.shape == x3.shape
    assert jnp.allclose(out3, ref3, atol=tol, rtol=tol)

    # Unknown layer name -> identity passthrough.
    ident = all_conv2d_forward(params, x, "not_a_layer")
    assert ident is x

    print("KERNEL_OK")
</pallas_src>

<mosaic_0001>
module attributes {stable_mosaic.version = 11 : i64} {
  func.func @kernel(%arg0: i32, %arg1: memref<128x1280xf32, #tpu.memory_space<vmem>>, %arg2: memref<1280x128xbf16, #tpu.memory_space<vmem>>, %arg3: memref<128x1280xbf16, #tpu.memory_space<vmem>>, %arg4: memref<1x1280xf32, #tpu.memory_space<vmem>>, %arg5: memref<128x1280xf32, #tpu.memory_space<vmem>>) attributes {dimension_semantics = [#tpu.dimension_semantics<parallel>], iteration_bounds = array<i64: 1>, scalar_prefetch = 0 : i64, scratch_operands = 0 : i64, tpu.core_type = #tpu.core_type<tc>, window_params = [{transform_indices = @transform_0, window_bounds = array<i64: 128, 1280>}, {pipeline_mode = #tpu.pipeline_mode<synchronous>, transform_indices = @transform_1, window_bounds = array<i64: 1280, 128>}, {pipeline_mode = #tpu.pipeline_mode<synchronous>, transform_indices = @transform_2, window_bounds = array<i64: 128, 1280>}, {pipeline_mode = #tpu.pipeline_mode<synchronous>, transform_indices = @transform_3, window_bounds = array<i64: 1, 1280>}, {transform_indices = @transform_4, window_bounds = array<i64: 128, 1280>}]} {
    %c0 = arith.constant 0 : index
    %c0_0 = arith.constant 0 : index
    %0 = vector.load %arg2[%c0, %c0_0] : memref<1280x128xbf16, #tpu.memory_space<vmem>>, vector<1280x128xbf16>
    %c0_1 = arith.constant 0 : index
    %c0_2 = arith.constant 0 : index
    %1 = vector.load %arg3[%c0_1, %c0_2] : memref<128x1280xbf16, #tpu.memory_space<vmem>>, vector<128x1280xbf16>
    %c0_3 = arith.constant 0 : index
    %c0_4 = arith.constant 0 : index
    %2 = vector.load %arg4[%c0_3, %c0_4] : memref<1x1280xf32, #tpu.memory_space<vmem>>, vector<1x1280xf32>
    %c0_5 = arith.constant 0 : index
    %c0_6 = arith.constant 0 : index
    %3 = vector.load %arg1[%c0_5, %c0_6] : memref<128x1280xf32, #tpu.memory_space<vmem>>, vector<128x1280xf32>
    %4 = arith.truncf %3 : vector<128x1280xf32> to vector<128x1280xbf16>
    %cst = arith.constant dense<0.000000e+00> : vector<128x128xf32>
    %5 = tpu.matmul %4, %0, %cst {dimension_numbers = #tpu.dot_dimension_numbers<[1], [0], [0], [1], [0, 0, 1, 1], [], []>} : vector<128x1280xbf16>, vector<1280x128xbf16>, vector<128x128xf32> -> vector<128x128xf32>
    %6 = arith.truncf %5 : vector<128x128xf32> to vector<128x128xbf16>
    %cst_7 = arith.constant dense<0.000000e+00> : vector<128x1280xf32>
    %7 = tpu.matmul %6, %1, %cst_7 {dimension_numbers = #tpu.dot_dimension_numbers<[1], [0], [0], [1], [0, 0, 1, 1], [], []>} : vector<128x128xbf16>, vector<128x1280xbf16>, vector<128x1280xf32> -> vector<128x1280xf32>
    %8 = vector.broadcast %2 : vector<1x1280xf32> to vector<128x1280xf32>
    %9 = arith.addf %7, %8 : vector<128x1280xf32>
    %c0_8 = arith.constant 0 : index
    %c0_9 = arith.constant 0 : index
    %10 = vector.load %arg5[%c0_8, %c0_9] : memref<128x1280xf32, #tpu.memory_space<vmem>>, vector<128x1280xf32>
    tpu.vector_store %arg5[%c0_8, %c0_9], %9 {strides = array<i32>} : memref<128x1280xf32, #tpu.memory_space<vmem>>, vector<128x1280xf32>,
    return
  }
  func.func @transform_0(%arg0: i32) -> (i32, i32) {
    %c0_i32 = arith.constant 0 : i32
    %c0_i32_0 = arith.constant 0 : i32
    return %arg0, %c0_i32 : i32, i32
  }
  func.func @transform_1(%arg0: i32) -> (i32, i32) {
    %c0_i32 = arith.constant 0 : i32
    %c0_i32_0 = arith.constant 0 : i32
    %c0_i32_1 = arith.constant 0 : i32
    return %c0_i32, %c0_i32_0 : i32, i32
  }
  func.func @transform_2(%arg0: i32) -> (i32, i32) {
    %c0_i32 = arith.constant 0 : i32
    %c0_i32_0 = arith.constant 0 : i32
    %c0_i32_1 = arith.constant 0 : i32
    return %c0_i32, %c0_i32_0 : i32, i32
  }
  func.func @transform_3(%arg0: i32) -> (i32, i32) {
    %c0_i32 = arith.constant 0 : i32
    %c0_i32_0 = arith.constant 0 : i32
    %c0_i32_1 = arith.constant 0 : i32
    return %c0_i32, %c0_i32_0 : i32, i32
  }
  func.func @transform_4(%arg0: i32) -> (i32, i32) {
    %c0_i32 = arith.constant 0 : i32
    %c0_i32_0 = arith.constant 0 : i32
    return %arg0, %c0_i32 : i32, i32
  }
}

</mosaic_0001>

<llo_original>
// kernel: tpu_custom_call.1
$region0: #{tpu_custom_call.1}
  #allocation0 [shape = 'u32[]', space=smem, size = 0x4, offset = 0x4, fixed_abs, tag = 'smem constant byte address 0x4 - core index']
  #allocation1 [shape = 'u32[144,128]{1,0:T(1,128)}', space=vmem, size = 0x12000, scoped, tag = 'internal scratch']
  %s0 = inlined_call_operand.hbm [shape: f32[128,1280], index: 0, kind: input, shape index: {}]
  %s1 = inlined_call_operand.hbm [shape: bf16[1280,128], index: 1, kind: input, shape index: {}]
  %s2 = inlined_call_operand.hbm [shape: bf16[128,1280], index: 2, kind: input, shape index: {}]
  %s3 = inlined_call_operand.vmem [shape: f32[1,1280], index: 3, kind: input, shape index: {}]
  %s4 = inlined_call_operand.hbm [shape: f32[128,1280], index: 4, kind: output, shape index: {}]
  %s5 = sld [smem:[#allocation0]]
  $region38: #{tpu_custom_call.1} parent=0
    _
  %s7 = ssub.s32 1, %s5
  %s8 = scalar_select 0, %s7, %s5
  $region1: #{tpu_custom_call.1} parent=0
    #allocation2 [shape = 'u8[655360]{0}', space=vmem, size = 0xa0000, scoped, tag = 'input window, operand 0, single buffered']
    #allocation3 [shape = 's32[1]{0}', space=sflag, size = 0x4, scoped, tag = 'scoped memory for tpu_custom_call.1']
    #allocation4 [shape = 's32[1]{0}', space=sflag, size = 0x4, scoped, tag = 'scoped memory for tpu_custom_call.1']
    #allocation5 [shape = 'u8[327680]{0}', space=vmem, size = 0x50000, scoped, tag = 'input window, operand 1, single buffered']
    #allocation6 [shape = 's32[1]{0}', space=sflag, size = 0x4, scoped, tag = 'scoped memory for tpu_custom_call.1']
    #allocation7 [shape = 'u8[327680]{0}', space=vmem, size = 0x50000, scoped, tag = 'input window, operand 2, single buffered']
    #allocation8 [shape = 'u8[655360]{0}', space=vmem, size = 0xa0000, scoped, tag = 'output window, operand 0, single buffered']
    %9 = vsyncpa [#allocation3], 0
    %10 = vsyncpa [#allocation6], 0
    %11 = vsyncpa [#allocation4], 0
    // Predicated region
    $region2: #{tpu_custom_call.1} parent=1 // pred_check
      _
    $region3: #{tpu_custom_call.1} parent=1 // pred_check_branch
      %13 = sbr.rel (0) target = $region5
    $region4: #{tpu_custom_call.1} parent=1 // pred_region
      %s15 = ssub.s32 20480, 20480
      %16 = vsyncadd [#allocation3], %s15
      %s17 = sshll.u32 [#allocation2], 4
      %s18 = int_to_ptr.vmem [resolvable:$true] %s17
      %23 = dma.hbm_to_vmem [thread:$0]  %s0, 20480, %s18, [#allocation3], 1280, 1280, 80
    $region5: #{tpu_custom_call.1} parent=1 // pred_fallthru
      _
    // Predicated region
    $region6: #{tpu_custom_call.1} parent=1 // pred_check
      _
    $region7: #{tpu_custom_call.1} parent=1 // pred_check_branch
      %25 = sbr.rel (0) target = $region9
    $region8: #{tpu_custom_call.1} parent=1 // pred_region
      %s27 = ssub.s32 10240, 10240
      %28 = vsyncadd [#allocation6], %s27
      %s29 = sshll.u32 [#allocation5], 4
      %s30 = int_to_ptr.vmem [resolvable:$true] %s29
      %35 = dma.hbm_to_vmem [thread:$0]  %s1, 10240, %s30, [#allocation6], 64, 64, 4
    $region9: #{tpu_custom_call.1} parent=1 // pred_fallthru
      _
    // Predicated region
    $region10: #{tpu_custom_call.1} parent=1 // pred_check
      _
    $region11: #{tpu_custom_call.1} parent=1 // pred_check_branch
      %37 = sbr.rel (0) target = $region13
    $region12: #{tpu_custom_call.1} parent=1 // pred_region
      %s39 = ssub.s32 10240, 10240
      %40 = vsyncadd [#allocation6], %s39
      %s41 = sshll.u32 [#allocation7], 4
      %s42 = int_to_ptr.vmem [resolvable:$true] %s41
      %47 = dma.hbm_to_vmem [thread:$0]  %s2, 10240, %s42, [#allocation6], 640, 640, 40
    $region13: #{tpu_custom_call.1} parent=1 // pred_fallthru
      _
    // Predicated region
    $region14: #{tpu_custom_call.1} parent=1 // pred_check
      _
    $region15: #{tpu_custom_call.1} parent=1 // pred_check_branch
      %49 = sbr.rel (0) target = $region17
    $region16: #{tpu_custom_call.1} parent=1 // pred_region
      _
    $region17: #{tpu_custom_call.1} parent=1 // pred_fallthru
      _
    // Predicated region
    $region18: #{tpu_custom_call.1} parent=1 // pred_check
      _
    $region19: #{tpu_custom_call.1} parent=1 // pred_check_branch
      %51 = sbr.rel (0) target = $region21
    $region20: #{tpu_custom_call.1} parent=1 // pred_region
      %52 = dma.done [#allocation3], 20480
    $region21: #{tpu_custom_call.1} parent=1 // pred_fallthru
      _
    // Predicated region
    $region22: #{tpu_custom_call.1} parent=1 // pred_check
      _
    $region23: #{tpu_custom_call.1} parent=1 // pred_check_branch
      %54 = sbr.rel (0) target = $region25
    $region24: #{tpu_custom_call.1} parent=1 // pred_region
      %55 = dma.done [#allocation6], 10240
    $region25: #{tpu_custom_call.1} parent=1 // pred_fallthru
      _
    // Predicated region
    $region26: #{tpu_custom_call.1} parent=1 // pred_check
      _
    $region27: #{tpu_custom_call.1} parent=1 // pred_check_branch
      %57 = sbr.rel (0) target = $region29
    $region28: #{tpu_custom_call.1} parent=1 // pred_region
      %58 = dma.done [#allocation6], 10240
    $region29: #{tpu_custom_call.1} parent=1 // pred_fallthru
      _
    %v60 = vld [vmem:[#allocation5] sm:$0xf]
    %v61 = vld [vmem:[#allocation5 + $0x4] sm:$0xf]
    %v62 = vld [vmem:[#allocation5 + $0x8] sm:$0xf]
    %v63 = vld [vmem:[#allocation5 + $0xc] sm:$0xf]
    %v64 = vld [vmem:[#allocation5 + $0x10] sm:$0xf]
    %v65 = vld [vmem:[#allocation5 + $0x14] sm:$0xf]
    %v66 = vld [vmem:[#allocation5 + $0x18] sm:$0xf]
    %v67 = vld [vmem:[#allocation5 + $0x1c] sm:$0xf]
    %v68 = vld [vmem:[#allocation5 + $0x20] sm:$0xf]
    %v69 = vld [vmem:[#allocation5 + $0x24] sm:$0xf]
    %v70 = vld [vmem:[#allocation5 + $0x28] sm:$0xf]
    %v71 = vld [vmem:[#allocation5 + $0x2c] sm:$0xf]
    %v72 = vld [vmem:[#allocation5 + $0x30] sm:$0xf]
    %v73 = vld [vmem:[#allocation5 + $0x34] sm:$0xf]
    %v74 = vld [vmem:[#allocation5 + $0x38] sm:$0xf]
    %v75 = vld [vmem:[#allocation5 + $0x3c] sm:$0xf]
    %v76 = vld [vmem:[#allocation5 + $0x40] sm:$0xf]
    %v77 = vld [vmem:[#allocation5 + $0x44] sm:$0xf]
    %v78 = vld [vmem:[#allocation5 + $0x48] sm:$0xf]
    %v79 = vld [vmem:[#allocation5 + $0x4c] sm:$0xf]
    %v80 = vld [vmem:[#allocation5 + $0x50] sm:$0xf]
    %v81 = vld [vmem:[#allocation5 + $0x54] sm:$0xf]
    %v82 = vld [vmem:[#allocation5 + $0x58] sm:$0xf]
    %v83 = vld [vmem:[#allocation5 + $0x5c] sm:$0xf]
    %v84 = vld [vmem:[#allocation5 + $0x60] sm:$0xf]
    %v85 = vld [vmem:[#allocation5 + $0x64] sm:$0xf]
    %v86 = vld [vmem:[#allocation5 + $0x68] sm:$0xf]
    %v87 = vld [vmem:[#allocation5 + $0x6c] sm:$0xf]
    %v88 = vld [vmem:[#allocation5 + $0x70] sm:$0xf]
    %v89 = vld [vmem:[#allocation5 + $0x74] sm:$0xf]
    %v90 = vld [vmem:[#allocation5 + $0x78] sm:$0xf]
    %v91 = vld [vmem:[#allocation5 + $0x7c] sm:$0xf]
    %v92 = vld [vmem:[#allocation5 + $0x80] sm:$0xf]
    %v93 = vld [vmem:[#allocation5 + $0x84] sm:$0xf]
    %v94 = vld [vmem:[#allocation5 + $0x88] sm:$0xf]
    %v95 = vld [vmem:[#allocation5 + $0x8c] sm:$0xf]
    %v96 = vld [vmem:[#allocation5 + $0x90] sm:$0xf]
    %v97 = vld [vmem:[#allocation5 + $0x94] sm:$0xf]
    %v98 = vld [vmem:[#allocation5 + $0x98] sm:$0xf]
    %v99 = vld [vmem:[#allocation5 + $0x9c] sm:$0xf]
    %v100 = vld [vmem:[#allocation5 + $0xa0] sm:$0xf]
    %v101 = vld [vmem:[#allocation5 + $0xa4] sm:$0xf]
    %v102 = vld [vmem:[#allocation5 + $0xa8] sm:$0xf]
    %v103 = vld [vmem:[#allocation5 + $0xac] sm:$0xf]
    %v104 = vld [vmem:[#allocation5 + $0xb0] sm:$0xf]
    %v105 = vld [vmem:[#allocation5 + $0xb4] sm:$0xf]
    %v106 = vld [vmem:[#allocation5 + $0xb8] sm:$0xf]
    %v107 = vld [vmem:[#allocation5 + $0xbc] sm:$0xf]
    %v108 = vld [vmem:[#allocation5 + $0xc0] sm:$0xf]
    %v109 = vld [vmem:[#allocation5 + $0xc4] sm:$0xf]
    %v110 = vld [vmem:[#allocation5 + $0xc8] sm:$0xf]
    %v111 = vld [vmem:[#allocation5 + $0xcc] sm:$0xf]
    %v112 = vld [vmem:[#allocation5 + $0xd0] sm:$0xf]
    %v113 = vld [vmem:[#allocation5 + $0xd4] sm:$0xf]
    %v114 = vld [vmem:[#allocation5 + $0xd8] sm:$0xf]
    %v115 = vld [vmem:[#allocation5 + $0xdc] sm:$0xf]
    %v116 = vld [vmem:[#allocation5 + $0xe0] sm:$0xf]
    %v117 = vld [vmem:[#allocation5 + $0xe4] sm:$0xf]
    %v118 = vld [vmem:[#allocation5 + $0xe8] sm:$0xf]
    %v119 = vld [vmem:[#allocation5 + $0xec] sm:$0xf]
    %v120 = vld [vmem:[#allocation5 + $0xf0] sm:$0xf]
    %v121 = vld [vmem:[#allocation5 + $0xf4] sm:$0xf]
    %v122 = vld [vmem:[#allocation5 + $0xf8] sm:$0xf]
    %v123 = vld [vmem:[#allocation5 + $0xfc] sm:$0xf]
    %v124 = vld [vmem:[#allocation5 + $0x100] sm:$0xf]
    %v125 = vld [vmem:[#allocation5 + $0x104] sm:$0xf]
    %v126 = vld [vmem:[#allocation5 + $0x108] sm:$0xf]
    %v127 = vld [vmem:[#allocation5 + $0x10c] sm:$0xf]
    %v128 = vld [vmem:[#allocation5 + $0x110] sm:$0xf]
    %v129 = vld [vmem:[#allocation5 + $0x114] sm:$0xf]
    %v130 = vld [vmem:[#allocation5 + $0x118] sm:$0xf]
    %v131 = vld [vmem:[#allocation5 + $0x11c] sm:$0xf]
    %v132 = vld [vmem:[#allocation5 + $0x120] sm:$0xf]
    %v133 = vld [vmem:[#allocation5 + $0x124] sm:$0xf]
    %v134 = vld [vmem:[#allocation5 + $0x128] sm:$0xf]
    %v135 = vld [vmem:[#allocation5 + $0x12c] sm:$0xf]
    %v136 = vld [vmem:[#allocation5 + $0x130] sm:$0xf]
    %v137 = vld [vmem:[#allocation5 + $0x134] sm:$0xf]
    %v138 = vld [vmem:[#allocation5 + $0x138] sm:$0xf]
    %v139 = vld [vmem:[#allocation5 + $0x13c] sm:$0xf]
    %v140 = vld [vmem:[#allocation5 + $0x140] sm:$0xf]
    %v141 = vld [vmem:[#allocation5 + $0x144] sm:$0xf]
    %v142 = vld [vmem:[#allocation5 + $0x148] sm:$0xf]
    %v143 = vld [vmem:[#allocation5 + $0x14c] sm:$0xf]
    %v144 = vld [vmem:[#allocation5 + $0x150] sm:$0xf]
    %v145 = vld [vmem:[#allocation5 + $0x154] sm:$0xf]
    %v146 = vld [vmem:[#allocation5 + $0x158] sm:$0xf]
    %v147 = vld [vmem:[#allocation5 + $0x15c] sm:$0xf]
    %v148 = vld [vmem:[#allocation5 + $0x160] sm:$0xf]
    %v149 = vld [vmem:[#allocation5 + $0x164] sm:$0xf]
    %v150 = vld [vmem:[#allocation5 + $0x168] sm:$0xf]
    %v151 = vld [vmem:[#allocation5 + $0x16c] sm:$0xf]
    %v152 = vld [vmem:[#allocation5 + $0x170] sm:$0xf]
    %v153 = vld [vmem:[#allocation5 + $0x174] sm:$0xf]
    %v154 = vld [vmem:[#allocation5 + $0x178] sm:$0xf]
    %v155 = vld [vmem:[#allocation5 + $0x17c] sm:$0xf]
    %v156 = vld [vmem:[#allocation5 + $0x180] sm:$0xf]
    %v157 = vld [vmem:[#allocation5 + $0x184] sm:$0xf]
    %v158 = vld [vmem:[#allocation5 + $0x188] sm:$0xf]
    %v159 = vld [vmem:[#allocation5 + $0x18c] sm:$0xf]
    %v160 = vld [vmem:[#allocation5 + $0x190] sm:$0xf]
    %v161 = vld [vmem:[#allocation5 + $0x194] sm:$0xf]
    %v162 = vld [vmem:[#allocation5 + $0x198] sm:$0xf]
    %v163 = vld [vmem:[#allocation5 + $0x19c] sm:$0xf]
    %v164 = vld [vmem:[#allocation5 + $0x1a0] sm:$0xf]
    %v165 = vld [vmem:[#allocation5 + $0x1a4] sm:$0xf]
    %v166 = vld [vmem:[#allocation5 + $0x1a8] sm:$0xf]
    %v167 = vld [vmem:[#allocation5 + $0x1ac] sm:$0xf]
    %v168 = vld [vmem:[#allocation5 + $0x1b0] sm:$0xf]
    %v169 = vld [vmem:[#allocation5 + $0x1b4] sm:$0xf]
    %v170 = vld [vmem:[#allocation5 + $0x1b8] sm:$0xf]
    %v171 = vld [vmem:[#allocation5 + $0x1bc] sm:$0xf]
    %v172 = vld [vmem:[#allocation5 + $0x1c0] sm:$0xf]
    %v173 = vld [vmem:[#allocation5 + $0x1c4] sm:$0xf]
    %v174 = vld [vmem:[#allocation5 + $0x1c8] sm:$0xf]
    %v175 = vld [vmem:[#allocation5 + $0x1cc] sm:$0xf]
    %v176 = vld [vmem:[#allocation5 + $0x1d0] sm:$0xf]
    %v177 = vld [vmem:[#allocation5 + $0x1d4] sm:$0xf]
    %v178 = vld [vmem:[#allocation5 + $0x1d8] sm:$0xf]
    %v179 = vld [vmem:[#allocation5 + $0x1dc] sm:$0xf]
    %v180 = vld [vmem:[#allocation5 + $0x1e0] sm:$0xf]
    %v181 = vld [vmem:[#allocation5 + $0x1e4] sm:$0xf]
    %v182 = vld [vmem:[#allocation5 + $0x1e8] sm:$0xf]
    %v183 = vld [vmem:[#allocation5 + $0x1ec] sm:$0xf]
    %v184 = vld [vmem:[#allocation5 + $0x1f0] sm:$0xf]
    %v185 = vld [vmem:[#allocation5 + $0x1f4] sm:$0xf]
    %v186 = vld [vmem:[#allocation5 + $0x1f8] sm:$0xf]
    %v187 = vld [vmem:[#allocation5 + $0x1fc] sm:$0xf]
    %v188 = vld [vmem:[#allocation5 + $0x200] sm:$0xf]
    %v189 = vld [vmem:[#allocation5 + $0x204] sm:$0xf]
    %v190 = vld [vmem:[#allocation5 + $0x208] sm:$0xf]
    %v191 = vld [vmem:[#allocation5 + $0x20c] sm:$0xf]
    %v192 = vld [vmem:[#allocation5 + $0x210] sm:$0xf]
    %v193 = vld [vmem:[#allocation5 + $0x214] sm:$0xf]
    %v194 = vld [vmem:[#allocation5 + $0x218] sm:$0xf]
    %v195 = vld [vmem:[#allocation5 + $0x21c] sm:$0xf]
    %v196 = vld [vmem:[#allocation5 + $0x220] sm:$0xf]
    %v197 = vld [vmem:[#allocation5 + $0x224] sm:$0xf]
    %v198 = vld [vmem:[#allocation5 + $0x228] sm:$0xf]
    %v199 = vld [vmem:[#allocation5 + $0x22c] sm:$0xf]
    %v200 = vld [vmem:[#allocation5 + $0x230] sm:$0xf]
    %v201 = vld [vmem:[#allocation5 + $0x234] sm:$0xf]
    %v202 = vld [vmem:[#allocation5 + $0x238] sm:$0xf]
    %v203 = vld [vmem:[#allocation5 + $0x23c] sm:$0xf]
    %v204 = vld [vmem:[#allocation5 + $0x240] sm:$0xf]
    %v205 = vld [vmem:[#allocation5 + $0x244] sm:$0xf]
    %v206 = vld [vmem:[#allocation5 + $0x248] sm:$0xf]
    %v207 = vld [vmem:[#allocation5 + $0x24c] sm:$0xf]
    %v208 = vld [vmem:[#allocation5 + $0x250] sm:$0xf]
    %v209 = vld [vmem:[#allocation5 + $0x254] sm:$0xf]
    %v210 = vld [vmem:[#allocation5 + $0x258] sm:$0xf]
    %v211 = vld [vmem:[#allocation5 + $0x25c] sm:$0xf]
    %v212 = vld [vmem:[#allocation5 + $0x260] sm:$0xf]
    %v213 = vld [vmem:[#allocation5 + $0x264] sm:$0xf]
    %v214 = vld [vmem:[#allocation5 + $0x268] sm:$0xf]
    %v215 = vld [vmem:[#allocation5 + $0x26c] sm:$0xf]
    %v216 = vld [vmem:[#allocation5 + $0x270] sm:$0xf]
    %v217 = vld [vmem:[#allocation5 + $0x274] sm:$0xf]
    %v218 = vld [vmem:[#allocation5 + $0x278] sm:$0xf]
    %v219 = vld [vmem:[#allocation5 + $0x27c] sm:$0xf]
    %v220 = vld [vmem:[#allocation7] sm:$0xff]
    %v221 = vld [vmem:[#allocation7 + $0x8] sm:$0xff]
    %v222 = vld [vmem:[#allocation7 + $0x10] sm:$0xff]
    %v223 = vld [vmem:[#allocation7 + $0x18] sm:$0xff]
    %v224 = vld [vmem:[#allocation7 + $0x20] sm:$0xff]
    %v225 = vld [vmem:[#allocation7 + $0x28] sm:$0xff]
    %v226 = vld [vmem:[#allocation7 + $0x30] sm:$0xff]
    %v227 = vld [vmem:[#allocation7 + $0x38] sm:$0xff]
    %v228 = vld [vmem:[#allocation7 + $0x40] sm:$0xff]
    %v229 = vld [vmem:[#allocation7 + $0x48] sm:$0xff]
    %v230 = vld [vmem:[#allocation7 + $0x50] sm:$0xff]
    %v231 = vld [vmem:[#allocation7 + $0x58] sm:$0xff]
    %v232 = vld [vmem:[#allocation7 + $0x60] sm:$0xff]
    %v233 = vld [vmem:[#allocation7 + $0x68] sm:$0xff]
    %v234 = vld [vmem:[#allocation7 + $0x70] sm:$0xff]
    %v235 = vld [vmem:[#allocation7 + $0x78] sm:$0xff]
    %v236 = vld [vmem:[#allocation7 + $0x80] sm:$0xff]
    %v237 = vld [vmem:[#allocation7 + $0x88] sm:$0xff]
    %v238 = vld [vmem:[#allocation7 + $0x90] sm:$0xff]
    %v239 = vld [vmem:[#allocation7 + $0x98] sm:$0xff]
    %v240 = vld [vmem:[#allocation7 + $0xa0] sm:$0xff]
    %v241 = vld [vmem:[#allocation7 + $0xa8] sm:$0xff]
    %v242 = vld [vmem:[#allocation7 + $0xb0] sm:$0xff]
    %v243 = vld [vmem:[#allocation7 + $0xb8] sm:$0xff]
    %v244 = vld [vmem:[#allocation7 + $0xc0] sm:$0xff]
    %v245 = vld [vmem:[#allocation7 + $0xc8] sm:$0xff]
    %v246 = vld [vmem:[#allocation7 + $0xd0] sm:$0xff]
    %v247 = vld [vmem:[#allocation7 + $0xd8] sm:$0xff]
    %v248 = vld [vmem:[#allocation7 + $0xe0] sm:$0xff]
    %v249 = vld [vmem:[#allocation7 + $0xe8] sm:$0xff]
    %v250 = vld [vmem:[#allocation7 + $0xf0] sm:$0xff]
    %v251 = vld [vmem:[#allocation7 + $0xf8] sm:$0xff]
    %v252 = vld [vmem:[#allocation7 + $0x100] sm:$0xff]
    %v253 = vld [vmem:[#allocation7 + $0x108] sm:$0xff]
    %v254 = vld [vmem:[#allocation7 + $0x110] sm:$0xff]
    %v255 = vld [vmem:[#allocation7 + $0x118] sm:$0xff]
    %v256 = vld [vmem:[#allocation7 + $0x120] sm:$0xff]
    %v257 = vld [vmem:[#allocation7 + $0x128] sm:$0xff]
    %v258 = vld [vmem:[#allocation7 + $0x130] sm:$0xff]
    %v259 = vld [vmem:[#allocation7 + $0x138] sm:$0xff]
    %v260 = vld [vmem:[#allocation7 + $0x140] sm:$0xff]
    %v261 = vld [vmem:[#allocation7 + $0x148] sm:$0xff]
    %v262 = vld [vmem:[#allocation7 + $0x150] sm:$0xff]
    %v263 = vld [vmem:[#allocation7 + $0x158] sm:$0xff]
    %v264 = vld [vmem:[#allocation7 + $0x160] sm:$0xff]
    %v265 = vld [vmem:[#allocation7 + $0x168] sm:$0xff]
    %v266 = vld [vmem:[#allocation7 + $0x170] sm:$0xff]
    %v267 = vld [vmem:[#allocation7 + $0x178] sm:$0xff]
    %v268 = vld [vmem:[#allocation7 + $0x180] sm:$0xff]
    %v269 = vld [vmem:[#allocation7 + $0x188] sm:$0xff]
    %v270 = vld [vmem:[#allocation7 + $0x190] sm:$0xff]
    %v271 = vld [vmem:[#allocation7 + $0x198] sm:$0xff]
    %v272 = vld [vmem:[#allocation7 + $0x1a0] sm:$0xff]
    %v273 = vld [vmem:[#allocation7 + $0x1a8] sm:$0xff]
    %v274 = vld [vmem:[#allocation7 + $0x1b0] sm:$0xff]
    %v275 = vld [vmem:[#allocation7 + $0x1b8] sm:$0xff]
    %v276 = vld [vmem:[#allocation7 + $0x1c0] sm:$0xff]
    %v277 = vld [vmem:[#allocation7 + $0x1c8] sm:$0xff]
    %v278 = vld [vmem:[#allocation7 + $0x1d0] sm:$0xff]
    %v279 = vld [vmem:[#allocation7 + $0x1d8] sm:$0xff]
    %v280 = vld [vmem:[#allocation7 + $0x1e0] sm:$0xff]
    %v281 = vld [vmem:[#allocation7 + $0x1e8] sm:$0xff]
    %v282 = vld [vmem:[#allocation7 + $0x1f0] sm:$0xff]
    %v283 = vld [vmem:[#allocation7 + $0x1f8] sm:$0xff]
    %v284 = vld [vmem:[#allocation7 + $0x200] sm:$0xff]
    %v285 = vld [vmem:[#allocation7 + $0x208] sm:$0xff]
    %v286 = vld [vmem:[#allocation7 + $0x210] sm:$0xff]
    %v287 = vld [vmem:[#allocation7 + $0x218] sm:$0xff]
    %v288 = vld [vmem:[#allocation7 + $0x220] sm:$0xff]
    %v289 = vld [vmem:[#allocation7 + $0x228] sm:$0xff]
    %v290 = vld [vmem:[#allocation7 + $0x230] sm:$0xff]
    %v291 = vld [vmem:[#allocation7 + $0x238] sm:$0xff]
    %v292 = vld [vmem:[#allocation7 + $0x240] sm:$0xff]
    %v293 = vld [vmem:[#allocation7 + $0x248] sm:$0xff]
    %v294 = vld [vmem:[#allocation7 + $0x250] sm:$0xff]
    %v295 = vld [vmem:[#allocation7 + $0x258] sm:$0xff]
    %v296 = vld [vmem:[#allocation7 + $0x260] sm:$0xff]
    %v297 = vld [vmem:[#allocation7 + $0x268] sm:$0xff]
    %v298 = vld [vmem:[#allocation7 + $0x270] sm:$0xff]
    %v299 = vld [vmem:[#allocation7 + $0x278] sm:$0xff]
    %v300 = vld [vmem:[%s3] sm:$0xff]
    %v301 = vld [vmem:[%s3 + $0x8] sm:$0x3]
    %v302 = vld [vmem:[#allocation2] sm:$0xff]
    %v303 = vld [vmem:[#allocation2 + $0x8] sm:$0xff]
    %v304 = vld [vmem:[#allocation2 + $0x10] sm:$0xff]
    %v305 = vld [vmem:[#allocation2 + $0x18] sm:$0xff]
    %v306 = vld [vmem:[#allocation2 + $0x20] sm:$0xff]
    %v307 = vld [vmem:[#allocation2 + $0x28] sm:$0xff]
    %v308 = vld [vmem:[#allocation2 + $0x30] sm:$0xff]
    %v309 = vld [vmem:[#allocation2 + $0x38] sm:$0xff]
    %v310 = vld [vmem:[#allocation2 + $0x40] sm:$0xff]
    %v311 = vld [vmem:[#allocation2 + $0x48] sm:$0xff]
    %v312 = vld [vmem:[#allocation2 + $0x50] sm:$0xff]
    %v313 = vld [vmem:[#allocation2 + $0x58] sm:$0xff]
    %v314 = vld [vmem:[#allocation2 + $0x60] sm:$0xff]
    %v315 = vld [vmem:[#allocation2 + $0x68] sm:$0xff]
    %v316 = vld [vmem:[#allocation2 + $0x70] sm:$0xff]
    %v317 = vld [vmem:[#allocation2 + $0x78] sm:$0xff]
    %v318 = vld [vmem:[#allocation2 + $0x80] sm:$0xff]
    %v319 = vld [vmem:[#allocation2 + $0x88] sm:$0xff]
    %v320 = vld [vmem:[#allocation2 + $0x90] sm:$0xff]
    %v321 = vld [vmem:[#allocation2 + $0x98] sm:$0xff]
    %v322 = vld [vmem:[#allocation2 + $0xa0] sm:$0xff]
    %v323 = vld [vmem:[#allocation2 + $0xa8] sm:$0xff]
    %v324 = vld [vmem:[#allocation2 + $0xb0] sm:$0xff]
    %v325 = vld [vmem:[#allocation2 + $0xb8] sm:$0xff]
    %v326 = vld [vmem:[#allocation2 + $0xc0] sm:$0xff]
    %v327 = vld [vmem:[#allocation2 + $0xc8] sm:$0xff]
    %v328 = vld [vmem:[#allocation2 + $0xd0] sm:$0xff]
    %v329 = vld [vmem:[#allocation2 + $0xd8] sm:$0xff]
    %v330 = vld [vmem:[#allocation2 + $0xe0] sm:$0xff]
    %v331 = vld [vmem:[#allocation2 + $0xe8] sm:$0xff]
    %v332 = vld [vmem:[#allocation2 + $0xf0] sm:$0xff]
    %v333 = vld [vmem:[#allocation2 + $0xf8] sm:$0xff]
    %v334 = vld [vmem:[#allocation2 + $0x100] sm:$0xff]
    %v335 = vld [vmem:[#allocation2 + $0x108] sm:$0xff]
    %v336 = vld [vmem:[#allocation2 + $0x110] sm:$0xff]
    %v337 = vld [vmem:[#allocation2 + $0x118] sm:$0xff]
    %v338 = vld [vmem:[#allocation2 + $0x120] sm:$0xff]
    %v339 = vld [vmem:[#allocation2 + $0x128] sm:$0xff]
    %v340 = vld [vmem:[#allocation2 + $0x130] sm:$0xff]
    %v341 = vld [vmem:[#allocation2 + $0x138] sm:$0xff]
    %v342 = vld [vmem:[#allocation2 + $0x140] sm:$0xff]
    %v343 = vld [vmem:[#allocation2 + $0x148] sm:$0xff]
    %v344 = vld [vmem:[#allocation2 + $0x150] sm:$0xff]
    %v345 = vld [vmem:[#allocation2 + $0x158] sm:$0xff]
    %v346 = vld [vmem:[#allocation2 + $0x160] sm:$0xff]
    %v347 = vld [vmem:[#allocation2 + $0x168] sm:$0xff]
    %v348 = vld [vmem:[#allocation2 + $0x170] sm:$0xff]
    %v349 = vld [vmem:[#allocation2 + $0x178] sm:$0xff]
    %v350 = vld [vmem:[#allocation2 + $0x180] sm:$0xff]
    %v351 = vld [vmem:[#allocation2 + $0x188] sm:$0xff]
    %v352 = vld [vmem:[#allocation2 + $0x190] sm:$0xff]
    %v353 = vld [vmem:[#allocation2 + $0x198] sm:$0xff]
    %v354 = vld [vmem:[#allocation2 + $0x1a0] sm:$0xff]
    %v355 = vld [vmem:[#allocation2 + $0x1a8] sm:$0xff]
    %v356 = vld [vmem:[#allocation2 + $0x1b0] sm:$0xff]
    %v357 = vld [vmem:[#allocation2 + $0x1b8] sm:$0xff]
    %v358 = vld [vmem:[#allocation2 + $0x1c0] sm:$0xff]
    %v359 = vld [vmem:[#allocation2 + $0x1c8] sm:$0xff]
    %v360 = vld [vmem:[#allocation2 + $0x1d0] sm:$0xff]
    %v361 = vld [vmem:[#allocation2 + $0x1d8] sm:$0xff]
    %v362 = vld [vmem:[#allocation2 + $0x1e0] sm:$0xff]
    %v363 = vld [vmem:[#allocation2 + $0x1e8] sm:$0xff]
    %v364 = vld [vmem:[#allocation2 + $0x1f0] sm:$0xff]
    %v365 = vld [vmem:[#allocation2 + $0x1f8] sm:$0xff]
    %v366 = vld [vmem:[#allocation2 + $0x200] sm:$0xff]
    %v367 = vld [vmem:[#allocation2 + $0x208] sm:$0xff]
    %v368 = vld [vmem:[#allocation2 + $0x210] sm:$0xff]
    %v369 = vld [vmem:[#allocation2 + $0x218] sm:$0xff]
    %v370 = vld [vmem:[#allocation2 + $0x220] sm:$0xff]
    %v371 = vld [vmem:[#allocation2 + $0x228] sm:$0xff]
    %v372 = vld [vmem:[#allocation2 + $0x230] sm:$0xff]
    %v373 = vld [vmem:[#allocation2 + $0x238] sm:$0xff]
    %v374 = vld [vmem:[#allocation2 + $0x240] sm:$0xff]
    %v375 = vld [vmem:[#allocation2 + $0x248] sm:$0xff]
    %v376 = vld [vmem:[#allocation2 + $0x250] sm:$0xff]
    %v377 = vld [vmem:[#allocation2 + $0x258] sm:$0xff]
    %v378 = vld [vmem:[#allocation2 + $0x260] sm:$0xff]
    %v379 = vld [vmem:[#allocation2 + $0x268] sm:$0xff]
    %v380 = vld [vmem:[#allocation2 + $0x270] sm:$0xff]
    %v381 = vld [vmem:[#allocation2 + $0x278] sm:$0xff]
    %v382 = vld [vmem:[#allocation2 + $0x280] sm:$0xff]
    %v383 = vld [vmem:[#allocation2 + $0x288] sm:$0xff]
    %v384 = vld [vmem:[#allocation2 + $0x290] sm:$0xff]
    %v385 = vld [vmem:[#allocation2 + $0x298] sm:$0xff]
    %v386 = vld [vmem:[#allocation2 + $0x2a0] sm:$0xff]
    %v387 = vld [vmem:[#allocation2 + $0x2a8] sm:$0xff]
    %v388 = vld [vmem:[#allocation2 + $0x2b0] sm:$0xff]
    %v389 = vld [vmem:[#allocation2 + $0x2b8] sm:$0xff]
    %v390 = vld [vmem:[#allocation2 + $0x2c0] sm:$0xff]
    %v391 = vld [vmem:[#allocation2 + $0x2c8] sm:$0xff]
    %v392 = vld [vmem:[#allocation2 + $0x2d0] sm:$0xff]
    %v393 = vld [vmem:[#allocation2 + $0x2d8] sm:$0xff]
    %v394 = vld [vmem:[#allocation2 + $0x2e0] sm:$0xff]
    %v395 = vld [vmem:[#allocation2 + $0x2e8] sm:$0xff]
    %v396 = vld [vmem:[#allocation2 + $0x2f0] sm:$0xff]
    %v397 = vld [vmem:[#allocation2 + $0x2f8] sm:$0xff]
    %v398 = vld [vmem:[#allocation2 + $0x300] sm:$0xff]
    %v399 = vld [vmem:[#allocation2 + $0x308] sm:$0xff]
    %v400 = vld [vmem:[#allocation2 + $0x310] sm:$0xff]
    %v401 = vld [vmem:[#allocation2 + $0x318] sm:$0xff]
    %v402 = vld [vmem:[#allocation2 + $0x320] sm:$0xff]
    %v403 = vld [vmem:[#allocation2 + $0x328] sm:$0xff]
    %v404 = vld [vmem:[#allocation2 + $0x330] sm:$0xff]
    %v405 = vld [vmem:[#allocation2 + $0x338] sm:$0xff]
    %v406 = vld [vmem:[#allocation2 + $0x340] sm:$0xff]
    %v407 = vld [vmem:[#allocation2 + $0x348] sm:$0xff]
    %v408 = vld [vmem:[#allocation2 + $0x350] sm:$0xff]
    %v409 = vld [vmem:[#allocation2 + $0x358] sm:$0xff]
    %v410 = vld [vmem:[#allocation2 + $0x360] sm:$0xff]
    %v411 = vld [vmem:[#allocation2 + $0x368] sm:$0xff]
    %v412 = vld [vmem:[#allocation2 + $0x370] sm:$0xff]
    %v413 = vld [vmem:[#allocation2 + $0x378] sm:$0xff]
    %v414 = vld [vmem:[#allocation2 + $0x380] sm:$0xff]
    %v415 = vld [vmem:[#allocation2 + $0x388] sm:$0xff]
    %v416 = vld [vmem:[#allocation2 + $0x390] sm:$0xff]
    %v417 = vld [vmem:[#allocation2 + $0x398] sm:$0xff]
    %v418 = vld [vmem:[#allocation2 + $0x3a0] sm:$0xff]
    %v419 = vld [vmem:[#allocation2 + $0x3a8] sm:$0xff]
    %v420 = vld [vmem:[#allocation2 + $0x3b0] sm:$0xff]
    %v421 = vld [vmem:[#allocation2 + $0x3b8] sm:$0xff]
    %v422 = vld [vmem:[#allocation2 + $0x3c0] sm:$0xff]
    %v423 = vld [vmem:[#allocation2 + $0x3c8] sm:$0xff]
    %v424 = vld [vmem:[#allocation2 + $0x3d0] sm:$0xff]
    %v425 = vld [vmem:[#allocation2 + $0x3d8] sm:$0xff]
    %v426 = vld [vmem:[#allocation2 + $0x3e0] sm:$0xff]
    %v427 = vld [vmem:[#allocation2 + $0x3e8] sm:$0xff]
    %v428 = vld [vmem:[#allocation2 + $0x3f0] sm:$0xff]
    %v429 = vld [vmem:[#allocation2 + $0x3f8] sm:$0xff]
    %v430 = vld [vmem:[#allocation2 + $0x400] sm:$0xff]
    %v431 = vld [vmem:[#allocation2 + $0x408] sm:$0xff]
    %v432 = vld [vmem:[#allocation2 + $0x410] sm:$0xff]
    %v433 = vld [vmem:[#allocation2 + $0x418] sm:$0xff]
    %v434 = vld [vmem:[#allocation2 + $0x420] sm:$0xff]
    %v435 = vld [vmem:[#allocation2 + $0x428] sm:$0xff]
    %v436 = vld [vmem:[#allocation2 + $0x430] sm:$0xff]
    %v437 = vld [vmem:[#allocation2 + $0x438] sm:$0xff]
    %v438 = vld [vmem:[#allocation2 + $0x440] sm:$0xff]
    %v439 = vld [vmem:[#allocation2 + $0x448] sm:$0xff]
    %v440 = vld [vmem:[#allocation2 + $0x450] sm:$0xff]
    %v441 = vld [vmem:[#allocation2 + $0x458] sm:$0xff]
    %v442 = vld [vmem:[#allocation2 + $0x460] sm:$0xff]
    %v443 = vld [vmem:[#allocation2 + $0x468] sm:$0xff]
    %v444 = vld [vmem:[#allocation2 + $0x470] sm:$0xff]
    %v445 = vld [vmem:[#allocation2 + $0x478] sm:$0xff]
    %v446 = vld [vmem:[#allocation2 + $0x480] sm:$0xff]
    %v447 = vld [vmem:[#allocation2 + $0x488] sm:$0xff]
    %v448 = vld [vmem:[#allocation2 + $0x490] sm:$0xff]
    %v449 = vld [vmem:[#allocation2 + $0x498] sm:$0xff]
    %v450 = vld [vmem:[#allocation2 + $0x4a0] sm:$0xff]
    %v451 = vld [vmem:[#allocation2 + $0x4a8] sm:$0xff]
    %v452 = vld [vmem:[#allocation2 + $0x4b0] sm:$0xff]
    %v453 = vld [vmem:[#allocation2 + $0x4b8] sm:$0xff]
    %v454 = vld [vmem:[#allocation2 + $0x4c0] sm:$0xff]
    %v455 = vld [vmem:[#allocation2 + $0x4c8] sm:$0xff]
    %v456 = vld [vmem:[#allocation2 + $0x4d0] sm:$0xff]
    %v457 = vld [vmem:[#allocation2 + $0x4d8] sm:$0xff]
    %v458 = vld [vmem:[#allocation2 + $0x4e0] sm:$0xff]
    %v459 = vld [vmem:[#allocation2 + $0x4e8] sm:$0xff]
    %v460 = vld [vmem:[#allocation2 + $0x4f0] sm:$0xff]
    %v461 = vld [vmem:[#allocation2 + $0x4f8] sm:$0xff]
    %v462 = vpack.c.bf16 %v312, %v302
    %v463 = vpack.c.bf16 %v313, %v303
    %v464 = vpack.c.bf16 %v314, %v304
    %v465 = vpack.c.bf16 %v315, %v305
    %v466 = vpack.c.bf16 %v316, %v306
    %v467 = vpack.c.bf16 %v317, %v307
    %v468 = vpack.c.bf16 %v318, %v308
    %v469 = vpack.c.bf16 %v319, %v309
    %v470 = vpack.c.bf16 %v320, %v310
    %v471 = vpack.c.bf16 %v321, %v311
    %v472 = vpack.c.bf16 %v332, %v322
    %v473 = vpack.c.bf16 %v333, %v323
    %v474 = vpack.c.bf16 %v334, %v324
    %v475 = vpack.c.bf16 %v335, %v325
    %v476 = vpack.c.bf16 %v336, %v326
    %v477 = vpack.c.bf16 %v337, %v327
    %v478 = vpack.c.bf16 %v338, %v328
    %v479 = vpack.c.bf16 %v339, %v329
    %v480 = vpack.c.bf16 %v340, %v330
    %v481 = vpack.c.bf16 %v341, %v331
    %v482 = vpack.c.bf16 %v352, %v342
    %v483 = vpack.c.bf16 %v353, %v343
    %v484 = vpack.c.bf16 %v354, %v344
    %v485 = vpack.c.bf16 %v355, %v345
    %v486 = vpack.c.bf16 %v356, %v346
    %v487 = vpack.c.bf16 %v357, %v347
    %v488 = vpack.c.bf16 %v358, %v348
    %v489 = vpack.c.bf16 %v359, %v349
    %v490 = vpack.c.bf16 %v360, %v350
    %v491 = vpack.c.bf16 %v361, %v351
    %v492 = vpack.c.bf16 %v372, %v362
    %v493 = vpack.c.bf16 %v373, %v363
    %v494 = vpack.c.bf16 %v374, %v364
    %v495 = vpack.c.bf16 %v375, %v365
    %v496 = vpack.c.bf16 %v376, %v366
    %v497 = vpack.c.bf16 %v377, %v367
    %v498 = vpack.c.bf16 %v378, %v368
    %v499 = vpack.c.bf16 %v379, %v369
    %v500 = vpack.c.bf16 %v380, %v370
    %v501 = vpack.c.bf16 %v381, %v371
    %v502 = vpack.c.bf16 %v392, %v382
    %v503 = vpack.c.bf16 %v393, %v383
    %v504 = vpack.c.bf16 %v394, %v384
    %v505 = vpack.c.bf16 %v395, %v385
    %v506 = vpack.c.bf16 %v396, %v386
    %v507 = vpack.c.bf16 %v397, %v387
    %v508 = vpack.c.bf16 %v398, %v388
    %v509 = vpack.c.bf16 %v399, %v389
    %v510 = vpack.c.bf16 %v400, %v390
    %v511 = vpack.c.bf16 %v401, %v391
    %v512 = vpack.c.bf16 %v412, %v402
    %v513 = vpack.c.bf16 %v413, %v403
    %v514 = vpack.c.bf16 %v414, %v404
    %v515 = vpack.c.bf16 %v415, %v405
    %v516 = vpack.c.bf16 %v416, %v406
    %v517 = vpack.c.bf16 %v417, %v407
    %v518 = vpack.c.bf16 %v418, %v408
    %v519 = vpack.c.bf16 %v419, %v409
    %v520 = vpack.c.bf16 %v420, %v410
    %v521 = vpack.c.bf16 %v421, %v411
    %v522 = vpack.c.bf16 %v432, %v422
    %v523 = vpack.c.bf16 %v433, %v423
    %v524 = vpack.c.bf16 %v434, %v424
    %v525 = vpack.c.bf16 %v435, %v425
    %v526 = vpack.c.bf16 %v436, %v426
    %v527 = vpack.c.bf16 %v437, %v427
    %v528 = vpack.c.bf16 %v438, %v428
    %v529 = vpack.c.bf16 %v439, %v429
    %v530 = vpack.c.bf16 %v440, %v430
    %v531 = vpack.c.bf16 %v441, %v431
    %v532 = vpack.c.bf16 %v452, %v442
    %v533 = vpack.c.bf16 %v453, %v443
    %v534 = vpack.c.bf16 %v454, %v444
    %v535 = vpack.c.bf16 %v455, %v445
    %v536 = vpack.c.bf16 %v456, %v446
    %v537 = vpack.c.bf16 %v457, %v447
    %v538 = vpack.c.bf16 %v458, %v448
    %v539 = vpack.c.bf16 %v459, %v449
    %v540 = vpack.c.bf16 %v460, %v450
    %v541 = vpack.c.bf16 %v461, %v451
    %v702 = vunpack.c.l.b16 %v60
    %v703 = vunpack.c.l.b16 %v61
    %v704 = vunpack.c.l.b16 %v62
    %v705 = vunpack.c.l.b16 %v63
    %v706 = vunpack.c.l.b16 %v64
    %v707 = vunpack.c.l.b16 %v65
    %v708 = vunpack.c.l.b16 %v66
    %v709 = vunpack.c.l.b16 %v67
    %v710 = vunpack.c.l.b16 %v68
    %v711 = vunpack.c.l.b16 %v69
    %v712 = vunpack.c.l.b16 %v70
    %v713 = vunpack.c.l.b16 %v71
    %v714 = vunpack.c.l.b16 %v72
    %v715 = vunpack.c.l.b16 %v73
    %v716 = vunpack.c.l.b16 %v74
    %v717 = vunpack.c.l.b16 %v75
    %v718 = vunpack.c.l.b16 %v76
    %v719 = vunpack.c.l.b16 %v77
    %v720 = vunpack.c.l.b16 %v78
    %v721 = vunpack.c.l.b16 %v79
    %v722 = vunpack.c.l.b16 %v80
    %v723 = vunpack.c.l.b16 %v81
    %v724 = vunpack.c.l.b16 %v82
    %v725 = vunpack.c.l.b16 %v83
    %v726 = vunpack.c.l.b16 %v84
    %v727 = vunpack.c.l.b16 %v85
    %v728 = vunpack.c.l.b16 %v86
    %v729 = vunpack.c.l.b16 %v87
    %v730 = vunpack.c.l.b16 %v88
    %v731 = vunpack.c.l.b16 %v89
    %v732 = vunpack.c.l.b16 %v90
    %v733 = vunpack.c.l.b16 %v91
    %v734 = vunpack.c.l.b16 %v92
    %v735 = vunpack.c.l.b16 %v93
    %v736 = vunpack.c.l.b16 %v94
    %v737 = vunpack.c.l.b16 %v95
    %v738 = vunpack.c.l.b16 %v96
    %v739 = vunpack.c.l.b16 %v97
    %v740 = vunpack.c.l.b16 %v98
    %v741 = vunpack.c.l.b16 %v99
    %v742 = vunpack.c.l.b16 %v100
    %v743 = vunpack.c.l.b16 %v101
    %v744 = vunpack.c.l.b16 %v102
    %v745 = vunpack.c.l.b16 %v103
    %v746 = vunpack.c.l.b16 %v104
    %v747 = vunpack.c.l.b16 %v105
    %v748 = vunpack.c.l.b16 %v106
    %v749 = vunpack.c.l.b16 %v107
    %v750 = vunpack.c.l.b16 %v108
    %v751 = vunpack.c.l.b16 %v109
    %v752 = vunpack.c.l.b16 %v110
    %v753 = vunpack.c.l.b16 %v111
    %v754 = vunpack.c.l.b16 %v112
    %v755 = vunpack.c.l.b16 %v113
    %v756 = vunpack.c.l.b16 %v114
    %v757 = vunpack.c.l.b16 %v115
    %v758 = vunpack.c.l.b16 %v116
    %v759 = vunpack.c.l.b16 %v117
    %v760 = vunpack.c.l.b16 %v118
    %v761 = vunpack.c.l.b16 %v119
    %v762 = vunpack.c.l.b16 %v120
    %v763 = vunpack.c.l.b16 %v121
    %v764 = vunpack.c.l.b16 %v122
    %v765 = vunpack.c.l.b16 %v123
    %v766 = vunpack.c.l.b16 %v124
    %v767 = vunpack.c.l.b16 %v125
    %v768 = vunpack.c.l.b16 %v126
    %v769 = vunpack.c.l.b16 %v127
    %v770 = vunpack.c.l.b16 %v128
    %v771 = vunpack.c.l.b16 %v129
    %v772 = vunpack.c.l.b16 %v130
    %v773 = vunpack.c.l.b16 %v131
    %v774 = vunpack.c.l.b16 %v132
    %v775 = vunpack.c.l.b16 %v133
    %v776 = vunpack.c.l.b16 %v134
    %v777 = vunpack.c.l.b16 %v135
    %v778 = vunpack.c.l.b16 %v136
    %v779 = vunpack.c.l.b16 %v137
    %v780 = vunpack.c.l.b16 %v138
    %v781 = vunpack.c.l.b16 %v139
    %v782 = vunpack.c.l.b16 %v140
    %v783 = vunpack.c.l.b16 %v141
    %v784 = vunpack.c.l.b16 %v142
    %v785 = vunpack.c.l.b16 %v143
    %v786 = vunpack.c.l.b16 %v144
    %v787 = vunpack.c.l.b16 %v145
    %v788 = vunpack.c.l.b16 %v146
    %v789 = vunpack.c.l.b16 %v147
    %v790 = vunpack.c.l.b16 %v148
    %v791 = vunpack.c.l.b16 %v149
    %v792 = vunpack.c.l.b16 %v150
    %v793 = vunpack.c.l.b16 %v151
    %v794 = vunpack.c.l.b16 %v152
    %v795 = vunpack.c.l.b16 %v153
    %v796 = vunpack.c.l.b16 %v154
    %v797 = vunpack.c.l.b16 %v155
    %v798 = vunpack.c.l.b16 %v156
    %v799 = vunpack.c.l.b16 %v157
    %v800 = vunpack.c.l.b16 %v158
    %v801 = vunpack.c.l.b16 %v159
    %v802 = vunpack.c.l.b16 %v160
    %v803 = vunpack.c.l.b16 %v161
    %v804 = vunpack.c.l.b16 %v162
    %v805 = vunpack.c.l.b16 %v163
    %v806 = vunpack.c.l.b16 %v164
    %v807 = vunpack.c.l.b16 %v165
    %v808 = vunpack.c.l.b16 %v166
    %v809 = vunpack.c.l.b16 %v167
    %v810 = vunpack.c.l.b16 %v168
    %v811 = vunpack.c.l.b16 %v169
    %v812 = vunpack.c.l.b16 %v170
    %v813 = vunpack.c.l.b16 %v171
    %v814 = vunpack.c.l.b16 %v172
    %v815 = vunpack.c.l.b16 %v173
    %v816 = vunpack.c.l.b16 %v174
    %v817 = vunpack.c.l.b16 %v175
    %v818 = vunpack.c.l.b16 %v176
    %v819 = vunpack.c.l.b16 %v177
    %v820 = vunpack.c.l.b16 %v178
    %v821 = vunpack.c.l.b16 %v179
    %v822 = vunpack.c.l.b16 %v180
    %v823 = vunpack.c.l.b16 %v181
    %v824 = vunpack.c.l.b16 %v182
    %v825 = vunpack.c.l.b16 %v183
    %v826 = vunpack.c.l.b16 %v184
    %v827 = vunpack.c.l.b16 %v185
    %v828 = vunpack.c.l.b16 %v186
    %v829 = vunpack.c.l.b16 %v187
    %v830 = vunpack.c.l.b16 %v188
    %v831 = vunpack.c.l.b16 %v189
    %v832 = vunpack.c.l.b16 %v190
    %v833 = vunpack.c.l.b16 %v191
    %v834 = vunpack.c.l.b16 %v192
    %v835 = vunpack.c.l.b16 %v193
    %v836 = vunpack.c.l.b16 %v194
    %v837 = vunpack.c.l.b16 %v195
    %v838 = vunpack.c.l.b16 %v196
    %v839 = vunpack.c.l.b16 %v197
    %v840 = vunpack.c.l.b16 %v198
    %v841 = vunpack.c.l.b16 %v199
    %v842 = vunpack.c.l.b16 %v200
    %v843 = vunpack.c.l.b16 %v201
    %v844 = vunpack.c.l.b16 %v202
    %v845 = vunpack.c.l.b16 %v203
    %v846 = vunpack.c.l.b16 %v204
    %v847 = vunpack.c.l.b16 %v205
    %v848 = vunpack.c.l.b16 %v206
    %v849 = vunpack.c.l.b16 %v207
    %v850 = vunpack.c.l.b16 %v208
    %v851 = vunpack.c.l.b16 %v209
    %v852 = vunpack.c.l.b16 %v210
    %v853 = vunpack.c.l.b16 %v211
    %v854 = vunpack.c.l.b16 %v212
    %v855 = vunpack.c.l.b16 %v213
    %v856 = vunpack.c.l.b16 %v214
    %v857 = vunpack.c.l.b16 %v215
    %v858 = vunpack.c.l.b16 %v216
    %v859 = vunpack.c.l.b16 %v217
    %v860 = vunpack.c.l.b16 %v218
    %v861 = vunpack.c.l.b16 %v219
    %v862 = vpack.c.b16 %v703, %v702
    %v863 = vpack.c.b16 %v705, %v704
    %v864 = vpack.c.b16 %v707, %v706
    %v865 = vpack.c.b16 %v709, %v708
    %v866 = vpack.c.b16 %v711, %v710
    %v867 = vpack.c.b16 %v713, %v712
    %v868 = vpack.c.b16 %v715, %v714
    %v869 = vpack.c.b16 %v717, %v716
    %v870 = vpack.c.b16 %v719, %v718
    %v871 = vpack.c.b16 %v721, %v720
    %v872 = vpack.c.b16 %v723, %v722
    %v873 = vpack.c.b16 %v725, %v724
    %v874 = vpack.c.b16 %v727, %v726
    %v875 = vpack.c.b16 %v729, %v728
    %v876 = vpack.c.b16 %v731, %v730
    %v877 = vpack.c.b16 %v733, %v732
    %v878 = vpack.c.b16 %v735, %v734
    %v879 = vpack.c.b16 %v737, %v736
    %v880 = vpack.c.b16 %v739, %v738
    %v881 = vpack.c.b16 %v741, %v740
    %v882 = vpack.c.b16 %v743, %v742
    %v883 = vpack.c.b16 %v745, %v744
    %v884 = vpack.c.b16 %v747, %v746
    %v885 = vpack.c.b16 %v749, %v748
    %v886 = vpack.c.b16 %v751, %v750
    %v887 = vpack.c.b16 %v753, %v752
    %v888 = vpack.c.b16 %v755, %v754
    %v889 = vpack.c.b16 %v757, %v756
    %v890 = vpack.c.b16 %v759, %v758
    %v891 = vpack.c.b16 %v761, %v760
    %v892 = vpack.c.b16 %v763, %v762
    %v893 = vpack.c.b16 %v765, %v764
    %v894 = vpack.c.b16 %v767, %v766
    %v895 = vpack.c.b16 %v769, %v768
    %v896 = vpack.c.b16 %v771, %v770
    %v897 = vpack.c.b16 %v773, %v772
    %v898 = vpack.c.b16 %v775, %v774
    %v899 = vpack.c.b16 %v777, %v776
    %v900 = vpack.c.b16 %v779, %v778
    %v901 = vpack.c.b16 %v781, %v780
    %v902 = vpack.c.b16 %v783, %v782
    %v903 = vpack.c.b16 %v785, %v784
    %v904 = vpack.c.b16 %v787, %v786
    %v905 = vpack.c.b16 %v789, %v788
    %v906 = vpack.c.b16 %v791, %v790
    %v907 = vpack.c.b16 %v793, %v792
    %v908 = vpack.c.b16 %v795, %v794
    %v909 = vpack.c.b16 %v797, %v796
    %v910 = vpack.c.b16 %v799, %v798
    %v911 = vpack.c.b16 %v801, %v800
    %v912 = vpack.c.b16 %v803, %v802
    %v913 = vpack.c.b16 %v805, %v804
    %v914 = vpack.c.b16 %v807, %v806
    %v915 = vpack.c.b16 %v809, %v808
    %v916 = vpack.c.b16 %v811, %v810
    %v917 = vpack.c.b16 %v813, %v812
    %v918 = vpack.c.b16 %v815, %v814
    %v919 = vpack.c.b16 %v817, %v816
    %v920 = vpack.c.b16 %v819, %v818
    %v921 = vpack.c.b16 %v821, %v820
    %v922 = vpack.c.b16 %v823, %v822
    %v923 = vpack.c.b16 %v825, %v824
    %v924 = vpack.c.b16 %v827, %v826
    %v925 = vpack.c.b16 %v829, %v828
    %v926 = vpack.c.b16 %v831, %v830
    %v927 = vpack.c.b16 %v833, %v832
    %v928 = vpack.c.b16 %v835, %v834
    %v929 = vpack.c.b16 %v837, %v836
    %v930 = vpack.c.b16 %v839, %v838
    %v931 = vpack.c.b16 %v841, %v840
    %v932 = vpack.c.b16 %v843, %v842
    %v933 = vpack.c.b16 %v845, %v844
    %v934 = vpack.c.b16 %v847, %v846
    %v935 = vpack.c.b16 %v849, %v848
    %v936 = vpack.c.b16 %v851, %v850
    %v937 = vpack.c.b16 %v853, %v852
    %v938 = vpack.c.b16 %v855, %v854
    %v939 = vpack.c.b16 %v857, %v856
    %v940 = vpack.c.b16 %v859, %v858
    %v941 = vpack.c.b16 %v861, %v860
    %1022 = vmatprep.subr.bf16.mxu0 0
    %1023 = vmatpush1.bf16.msra.mxu0 %v862
    %1024 = vmatprep.subr.bf16.mxu0 0
    %1025 = vmatpush1.bf16.msra.mxu0 %v863
    %1026 = vmatprep.subr.bf16.mxu0 0
    %1027 = vmatpush1.bf16.msra.mxu0 %v864
    %1028 = vmatprep.subr.bf16.mxu0 0
    %1029 = vmatpush1.bf16.msra.mxu0 %v865
    %1030 = vmatprep.subr.bf16.mxu0 0
    %1031 = vmatpush1.bf16.msra.mxu0 %v866
    %1032 = vmatprep.subr.bf16.mxu0 0
    %1033 = vmatpush1.bf16.msra.mxu0 %v867
    %1034 = vmatprep.subr.bf16.mxu0 0
    %1035 = vmatpush1.bf16.msra.mxu0 %v868
    %1036 = vmatprep.subr.bf16.mxu0 0
    %1037 = vmatpush1.bf16.msra.mxu0 %v869
    %1038 = vmatprep.subr.bf16.mxu0 0
    %1039 = vmatpush1.bf16.msra.mxu0 %v870
    %1040 = vmatprep.subr.bf16.mxu0 0
    %1041 = vmatpush1.bf16.msra.mxu0 %v871
    %1042 = vmatprep.subr.bf16.mxu0 0
    %1043 = vmatpush1.bf16.msra.mxu0 %v872
    %1044 = vmatprep.subr.bf16.mxu0 0
    %1045 = vmatpush1.bf16.msra.mxu0 %v873
    %1046 = vmatprep.subr.bf16.mxu0 0
    %1047 = vmatpush1.bf16.msra.mxu0 %v874
    %1048 = vmatprep.subr.bf16.mxu0 0
    %1049 = vmatpush1.bf16.msra.mxu0 %v875
    %1050 = vmatprep.subr.bf16.mxu0 0
    %1051 = vmatpush1.bf16.msra.mxu0 %v876
    %1052 = vmatprep.subr.bf16.mxu0 0
    %1053 = vmatpush1.bf16.msra.mxu0 %v877
    %1054 = vmatprep.mubr.bf16.mxu0 %v463
    %1055 = vmatmul.mubr.bf16.gmra.mrb[0].mxu0 %v462
    %v1056 = vpop.f32.mrb[0].mxu0
    %v1057 = vadd.f32 0.0, %v1056
    %v1058 = vpop.f32.mrb[0].mxu0
    %v1059 = vpop.f32.mrb[0].mxu0
    %v1060 = vadd.f32 0.0, %v1059
    %v1061 = vpop.f32.mrb[0].mxu0
    %1062 = vmatprep.mubr.bf16.mxu0 %v473
    %1063 = vmatmul.mubr.bf16.gmra.mrb[0].mxu0 %v472
    %v1064 = vpop.f32.mrb[0].mxu0
    %v1065 = vadd.f32 0.0, %v1064
    %v1066 = vpop.f32.mrb[0].mxu0
    %v1067 = vpop.f32.mrb[0].mxu0
    %v1068 = vadd.f32 0.0, %v1067
    %v1069 = vpop.f32.mrb[0].mxu0
    %1070 = vmatprep.mubr.bf16.mxu0 %v483
    %1071 = vmatmul.mubr.bf16.gmra.mrb[0].mxu0 %v482
    %v1072 = vpop.f32.mrb[0].mxu0
    %v1073 = vadd.f32 0.0, %v1072
    %v1074 = vpop.f32.mrb[0].mxu0
    %v1075 = vpop.f32.mrb[0].mxu0
    %v1076 = vadd.f32 0.0, %v1075
    %v1077 = vpop.f32.mrb[0].mxu0
    %1078 = vmatprep.mubr.bf16.mxu0 %v493
    %1079 = vmatmul.mubr.bf16.gmra.mrb[0].mxu0 %v492
    %v1080 = vpop.f32.mrb[0].mxu0
    %v1081 = vadd.f32 0.0, %v1080
    %v1082 = vpop.f32.mrb[0].mxu0
    %v1083 = vpop.f32.mrb[0].mxu0
    %v1084 = vadd.f32 0.0, %v1083
    %v1085 = vpop.f32.mrb[0].mxu0
    %1086 = vmatprep.mubr.bf16.mxu0 %v503
    %1087 = vmatmul.mubr.bf16.gmra.mrb[0].mxu0 %v502
    %v1088 = vpop.f32.mrb[0].mxu0
    %v1089 = vadd.f32 0.0, %v1088
    %v1090 = vpop.f32.mrb[0].mxu0
    %v1091 = vpop.f32.mrb[0].mxu0
    %v1092 = vadd.f32 0.0, %v1091
    %v1093 = vpop.f32.mrb[0].mxu0
    %1094 = vmatprep.mubr.bf16.mxu0 %v513
    %1095 = vmatmul.mubr.bf16.gmra.mrb[0].mxu0 %v512
    %v1096 = vpop.f32.mrb[0].mxu0
    %v1097 = vadd.f32 0.0, %v1096
    %v1098 = vpop.f32.mrb[0].mxu0
    %v1099 = vpop.f32.mrb[0].mxu0
    %v1100 = vadd.f32 0.0, %v1099
    %v1101 = vpop.f32.mrb[0].mxu0
    %1102 = vmatprep.mubr.bf16.mxu0 %v523
    %1103 = vmatmul.mubr.bf16.gmra.mrb[0].mxu0 %v522
    %v1104 = vpop.f32.mrb[0].mxu0
    %v1105 = vadd.f32 0.0, %v1104
    %v1106 = vpop.f32.mrb[0].mxu0
    %v1107 = vpop.f32.mrb[0].mxu0
    %v1108 = vadd.f32 0.0, %v1107
    %v1109 = vpop.f32.mrb[0].mxu0
    %1110 = vmatprep.mubr.bf16.mxu0 %v533
    %1111 = vmatmul.mubr.bf16.gmra.mrb[0].mxu0 %v532
    %v1112 = vpop.f32.mrb[0].mxu0
    %v1113 = vadd.f32 0.0, %v1112
    %v1114 = vpop.f32.mrb[0].mxu0
    %v1115 = vpop.f32.mrb[0].mxu0
    %v1116 = vadd.f32 0.0, %v1115
    %v1117 = vpop.f32.mrb[0].mxu0
    %1118 = vdwg.mxu0
    %1119 = vmatprep.subr.bf16.mxu0 0
    %1120 = vmatpush1.bf16.msra.mxu0 %v878
    %1121 = vmatprep.subr.bf16.mxu0 0
    %1122 = vmatpush1.bf16.msra.mxu0 %v879
    %1123 = vmatprep.subr.bf16.mxu0 0
    %1124 = vmatpush1.bf16.msra.mxu0 %v880
    %1125 = vmatprep.subr.bf16.mxu0 0
    %1126 = vmatpush1.bf16.msra.mxu0 %v881
    %1127 = vmatprep.subr.bf16.mxu0 0
    %1128 = vmatpush1.bf16.msra.mxu0 %v882
    %1129 = vmatprep.subr.bf16.mxu0 0
    %1130 = vmatpush1.bf16.msra.mxu0 %v883
    %1131 = vmatprep.subr.bf16.mxu0 0
    %1132 = vmatpush1.bf16.msra.mxu0 %v884
    %1133 = vmatprep.subr.bf16.mxu0 0
    %1134 = vmatpush1.bf16.msra.mxu0 %v885
    %1135 = vmatprep.subr.bf16.mxu0 0
    %1136 = vmatpush1.bf16.msra.mxu0 %v886
    %1137 = vmatprep.subr.bf16.mxu0 0
    %1138 = vmatpush1.bf16.msra.mxu0 %v887
    %1139 = vmatprep.subr.bf16.mxu0 0
    %1140 = vmatpush1.bf16.msra.mxu0 %v888
    %1141 = vmatprep.subr.bf16.mxu0 0
    %1142 = vmatpush1.bf16.msra.mxu0 %v889
    %1143 = vmatprep.subr.bf16.mxu0 0
    %1144 = vmatpush1.bf16.msra.mxu0 %v890
    %1145 = vmatprep.subr.bf16.mxu0 0
    %1146 = vmatpush1.bf16.msra.mxu0 %v891
    %1147 = vmatprep.subr.bf16.mxu0 0
    %1148 = vmatpush1.bf16.msra.mxu0 %v892
    %1149 = vmatprep.subr.bf16.mxu0 0
    %1150 = vmatpush1.bf16.msra.mxu0 %v893
    %1151 = vmatprep.mubr.bf16.mxu0 %v465
    %1152 = vmatmul.mubr.bf16.gmra.mrb[0].mxu0 %v464
    %v1153 = vpop.f32.mrb[0].mxu0
    %v1154 = vadd.f32 %v1057, %v1153
    %v1155 = vpop.f32.mrb[0].mxu0
    %v1156 = vpop.f32.mrb[0].mxu0
    %v1157 = vadd.f32 %v1060, %v1156
    %v1158 = vpop.f32.mrb[0].mxu0
    %1159 = vmatprep.mubr.bf16.mxu0 %v475
    %1160 = vmatmul.mubr.bf16.gmra.mrb[0].mxu0 %v474
    %v1161 = vpop.f32.mrb[0].mxu0
    %v1162 = vadd.f32 %v1065, %v1161
    %v1163 = vpop.f32.mrb[0].mxu0
    %v1164 = vpop.f32.mrb[0].mxu0
    %v1165 = vadd.f32 %v1068, %v1164
    %v1166 = vpop.f32.mrb[0].mxu0
    %1167 = vmatprep.mubr.bf16.mxu0 %v485
    %1168 = vmatmul.mubr.bf16.gmra.mrb[0].mxu0 %v484
    %v1169 = vpop.f32.mrb[0].mxu0
    %v1170 = vadd.f32 %v1073, %v1169
    %v1171 = vpop.f32.mrb[0].mxu0
    %v1172 = vpop.f32.mrb[0].mxu0
    %v1173 = vadd.f32 %v1076, %v1172
    %v1174 = vpop.f32.mrb[0].mxu0
    %1175 = vmatprep.mubr.bf16.mxu0 %v495
    %1176 = vmatmul.mubr.bf16.gmra.mrb[0].mxu0 %v494
    %v1177 = vpop.f32.mrb[0].mxu0
    %v1178 = vadd.f32 %v1081, %v1177
    %v1179 = vpop.f32.mrb[0].mxu0
    %v1180 = vpop.f32.mrb[0].mxu0
    %v1181 = vadd.f32 %v1084, %v1180
    %v1182 = vpop.f32.mrb[0].mxu0
    %1183 = vmatprep.mubr.bf16.mxu0 %v505
    %1184 = vmatmul.mubr.bf16.gmra.mrb[0].mxu0 %v504
    %v1185 = vpop.f32.mrb[0].mxu0
    %v1186 = vadd.f32 %v1089, %v1185
    %v1187 = vpop.f32.mrb[0].mxu0
    %v1188 = vpop.f32.mrb[0].mxu0
    %v1189 = vadd.f32 %v1092, %v1188
    %v1190 = vpop.f32.mrb[0].mxu0
    %1191 = vmatprep.mubr.bf16.mxu0 %v515
    %1192 = vmatmul.mubr.bf16.gmra.mrb[0].mxu0 %v514
    %v1193 = vpop.f32.mrb[0].mxu0
    %v1194 = vadd.f32 %v1097, %v1193
    %v1195 = vpop.f32.mrb[0].mxu0
    %v1196 = vpop.f32.mrb[0].mxu0
    %v1197 = vadd.f32 %v1100, %v1196
    %v1198 = vpop.f32.mrb[0].mxu0
    %1199 = vmatprep.mubr.bf16.mxu0 %v525
    %1200 = vmatmul.mubr.bf16.gmra.mrb[0].mxu0 %v524
    %v1201 = vpop.f32.mrb[0].mxu0
    %v1202 = vadd.f32 %v1105, %v1201
    %v1203 = vpop.f32.mrb[0].mxu0
    %v1204 = vpop.f32.mrb[0].mxu0
    %v1205 = vadd.f32 %v1108, %v1204
    %v1206 = vpop.f32.mrb[0].mxu0
    %1207 = vmatprep.mubr.bf16.mxu0 %v535
    %1208 = vmatmul.mubr.bf16.gmra.mrb[0].mxu0 %v534
    %v1209 = vpop.f32.mrb[0].mxu0
    %v1210 = vadd.f32 %v1113, %v1209
    %v1211 = vpop.f32.mrb[0].mxu0
    %v1212 = vpop.f32.mrb[0].mxu0
    %v1213 = vadd.f32 %v1116, %v1212
    %v1214 = vpop.f32.mrb[0].mxu0
    %1215 = vdwg.mxu0
    %1216 = vmatprep.subr.bf16.mxu0 0
    %1217 = vmatpush1.bf16.msra.mxu0 %v894
    %1218 = vmatprep.subr.bf16.mxu0 0
    %1219 = vmatpush1.bf16.msra.mxu0 %v895
    %1220 = vmatprep.subr.bf16.mxu0 0
    %1221 = vmatpush1.bf16.msra.mxu0 %v896
    %1222 = vmatprep.subr.bf16.mxu0 0
    %1223 = vmatpush1.bf16.msra.mxu0 %v897
    %1224 = vmatprep.subr.bf16.mxu0 0
    %1225 = vmatpush1.bf16.msra.mxu0 %v898
    %1226 = vmatprep.subr.bf16.mxu0 0
    %1227 = vmatpush1.bf16.msra.mxu0 %v899
    %1228 = vmatprep.subr.bf16.mxu0 0
    %1229 = vmatpush1.bf16.msra.mxu0 %v900
    %1230 = vmatprep.subr.bf16.mxu0 0
    %1231 = vmatpush1.bf16.msra.mxu0 %v901
    %1232 = vmatprep.subr.bf16.mxu0 0
    %1233 = vmatpush1.bf16.msra.mxu0 %v902
    %1234 = vmatprep.subr.bf16.mxu0 0
    %1235 = vmatpush1.bf16.msra.mxu0 %v903
    %1236 = vmatprep.subr.bf16.mxu0 0
    %1237 = vmatpush1.bf16.msra.mxu0 %v904
    %1238 = vmatprep.subr.bf16.mxu0 0
    %1239 = vmatpush1.bf16.msra.mxu0 %v905
    %1240 = vmatprep.subr.bf16.mxu0 0
    %1241 = vmatpush1.bf16.msra.mxu0 %v906
    %1242 = vmatprep.subr.bf16.mxu0 0
    %1243 = vmatpush1.bf16.msra.mxu0 %v907
    %1244 = vmatprep.subr.bf16.mxu0 0
    %1245 = vmatpush1.bf16.msra.mxu0 %v908
    %1246 = vmatprep.subr.bf16.mxu0 0
    %1247 = vmatpush1.bf16.msra.mxu0 %v909
    %1248 = vmatprep.mubr.bf16.mxu0 %v467
    %1249 = vmatmul.mubr.bf16.gmra.mrb[0].mxu0 %v466
    %v1250 = vpop.f32.mrb[0].mxu0
    %v1251 = vadd.f32 %v1154, %v1250
    %v1252 = vpop.f32.mrb[0].mxu0
    %v1253 = vpop.f32.mrb[0].mxu0
    %v1254 = vadd.f32 %v1157, %v1253
    %v1255 = vpop.f32.mrb[0].mxu0
    %1256 = vmatprep.mubr.bf16.mxu0 %v477
    %1257 = vmatmul.mubr.bf16.gmra.mrb[0].mxu0 %v476
    %v1258 = vpop.f32.mrb[0].mxu0
    %v1259 = vadd.f32 %v1162, %v1258
    %v1260 = vpop.f32.mrb[0].mxu0
    %v1261 = vpop.f32.mrb[0].mxu0
    %v1262 = vadd.f32 %v1165, %v1261
    %v1263 = vpop.f32.mrb[0].mxu0
    %1264 = vmatprep.mubr.bf16.mxu0 %v487
    %1265 = vmatmul.mubr.bf16.gmra.mrb[0].mxu0 %v486
    %v1266 = vpop.f32.mrb[0].mxu0
    %v1267 = vadd.f32 %v1170, %v1266
    %v1268 = vpop.f32.mrb[0].mxu0
    %v1269 = vpop.f32.mrb[0].mxu0
    %v1270 = vadd.f32 %v1173, %v1269
    %v1271 = vpop.f32.mrb[0].mxu0
    %1272 = vmatprep.mubr.bf16.mxu0 %v497
    %1273 = vmatmul.mubr.bf16.gmra.mrb[0].mxu0 %v496
    %v1274 = vpop.f32.mrb[0].mxu0
    %v1275 = vadd.f32 %v1178, %v1274
    %v1276 = vpop.f32.mrb[0].mxu0
    %v1277 = vpop.f32.mrb[0].mxu0
    %v1278 = vadd.f32 %v1181, %v1277
    %v1279 = vpop.f32.mrb[0].mxu0
    %1280 = vmatprep.mubr.bf16.mxu0 %v507
    %1281 = vmatmul.mubr.bf16.gmra.mrb[0].mxu0 %v506
    %v1282 = vpop.f32.mrb[0].mxu0
    %v1283 = vadd.f32 %v1186, %v1282
    %v1284 = vpop.f32.mrb[0].mxu0
    %v1285 = vpop.f32.mrb[0].mxu0
    %v1286 = vadd.f32 %v1189, %v1285
    %v1287 = vpop.f32.mrb[0].mxu0
    %1288 = vmatprep.mubr.bf16.mxu0 %v517
    %1289 = vmatmul.mubr.bf16.gmra.mrb[0].mxu0 %v516
    %v1290 = vpop.f32.mrb[0].mxu0
    %v1291 = vadd.f32 %v1194, %v1290
    %v1292 = vpop.f32.mrb[0].mxu0
    %v1293 = vpop.f32.mrb[0].mxu0
    %v1294 = vadd.f32 %v1197, %v1293
    %v1295 = vpop.f32.mrb[0].mxu0
    %1296 = vmatprep.mubr.bf16.mxu0 %v527
    %1297 = vmatmul.mubr.bf16.gmra.mrb[0].mxu0 %v526
    %v1298 = vpop.f32.mrb[0].mxu0
    %v1299 = vadd.f32 %v1202, %v1298
    %v1300 = vpop.f32.mrb[0].mxu0
    %v1301 = vpop.f32.mrb[0].mxu0
    %v1302 = vadd.f32 %v1205, %v1301
    %v1303 = vpop.f32.mrb[0].mxu0
    %1304 = vmatprep.mubr.bf16.mxu0 %v537
    %1305 = vmatmul.mubr.bf16.gmra.mrb[0].mxu0 %v536
    %v1306 = vpop.f32.mrb[0].mxu0
    %v1307 = vadd.f32 %v1210, %v1306
    %v1308 = vpop.f32.mrb[0].mxu0
    %v1309 = vpop.f32.mrb[0].mxu0
    %v1310 = vadd.f32 %v1213, %v1309
    %v1311 = vpop.f32.mrb[0].mxu0
    %1312 = vdwg.mxu0
    %1313 = vmatprep.subr.bf16.mxu0 0
    %1314 = vmatpush1.bf16.msra.mxu0 %v910
    %1315 = vmatprep.subr.bf16.mxu0 0
    %1316 = vmatpush1.bf16.msra.mxu0 %v911
    %1317 = vmatprep.subr.bf16.mxu0 0
    %1318 = vmatpush1.bf16.msra.mxu0 %v912
    %1319 = vmatprep.subr.bf16.mxu0 0
    %1320 = vmatpush1.bf16.msra.mxu0 %v913
    %1321 = vmatprep.subr.bf16.mxu0 0
    %1322 = vmatpush1.bf16.msra.mxu0 %v914
    %1323 = vmatprep.subr.bf16.mxu0 0
    %1324 = vmatpush1.bf16.msra.mxu0 %v915
    %1325 = vmatprep.subr.bf16.mxu0 0
    %1326 = vmatpush1.bf16.msra.mxu0 %v916
    %1327 = vmatprep.subr.bf16.mxu0 0
    %1328 = vmatpush1.bf16.msra.mxu0 %v917
    %1329 = vmatprep.subr.bf16.mxu0 0
    %1330 = vmatpush1.bf16.msra.mxu0 %v918
    %1331 = vmatprep.subr.bf16.mxu0 0
    %1332 = vmatpush1.bf16.msra.mxu0 %v919
    %1333 = vmatprep.subr.bf16.mxu0 0
    %1334 = vmatpush1.bf16.msra.mxu0 %v920
    %1335 = vmatprep.subr.bf16.mxu0 0
    %1336 = vmatpush1.bf16.msra.mxu0 %v921
    %1337 = vmatprep.subr.bf16.mxu0 0
    %1338 = vmatpush1.bf16.msra.mxu0 %v922
    %1339 = vmatprep.subr.bf16.mxu0 0
    %1340 = vmatpush1.bf16.msra.mxu0 %v923
    %1341 = vmatprep.subr.bf16.mxu0 0
    %1342 = vmatpush1.bf16.msra.mxu0 %v924
    %1343 = vmatprep.subr.bf16.mxu0 0
    %1344 = vmatpush1.bf16.msra.mxu0 %v925
    %1345 = vmatprep.mubr.bf16.mxu0 %v469
    %1346 = vmatmul.mubr.bf16.gmra.mrb[0].mxu0 %v468
    %v1347 = vpop.f32.mrb[0].mxu0
    %v1348 = vadd.f32 %v1251, %v1347
    %v1349 = vpop.f32.mrb[0].mxu0
    %v1350 = vpop.f32.mrb[0].mxu0
    %v1351 = vadd.f32 %v1254, %v1350
    %v1352 = vpop.f32.mrb[0].mxu0
    %1353 = vmatprep.mubr.bf16.mxu0 %v479
    %1354 = vmatmul.mubr.bf16.gmra.mrb[0].mxu0 %v478
    %v1355 = vpop.f32.mrb[0].mxu0
    %v1356 = vadd.f32 %v1259, %v1355
    %v1357 = vpop.f32.mrb[0].mxu0
    %v1358 = vpop.f32.mrb[0].mxu0
    %v1359 = vadd.f32 %v1262, %v1358
    %v1360 = vpop.f32.mrb[0].mxu0
    %1361 = vmatprep.mubr.bf16.mxu0 %v489
    %1362 = vmatmul.mubr.bf16.gmra.mrb[0].mxu0 %v488
    %v1363 = vpop.f32.mrb[0].mxu0
    %v1364 = vadd.f32 %v1267, %v1363
    %v1365 = vpop.f32.mrb[0].mxu0
    %v1366 = vpop.f32.mrb[0].mxu0
    %v1367 = vadd.f32 %v1270, %v1366
    %v1368 = vpop.f32.mrb[0].mxu0
    %1369 = vmatprep.mubr.bf16.mxu0 %v499
    %1370 = vmatmul.mubr.bf16.gmra.mrb[0].mxu0 %v498
    %v1371 = vpop.f32.mrb[0].mxu0
    %v1372 = vadd.f32 %v1275, %v1371
    %v1373 = vpop.f32.mrb[0].mxu0
    %v1374 = vpop.f32.mrb[0].mxu0
    %v1375 = vadd.f32 %v1278, %v1374
    %v1376 = vpop.f32.mrb[0].mxu0
    %1377 = vmatprep.mubr.bf16.mxu0 %v509
    %1378 = vmatmul.mubr.bf16.gmra.mrb[0].mxu0 %v508
    %v1379 = vpop.f32.mrb[0].mxu0
    %v1380 = vadd.f32 %v1283, %v1379
    %v1381 = vpop.f32.mrb[0].mxu0
    %v1382 = vpop.f32.mrb[0].mxu0
    %v1383 = vadd.f32 %v1286, %v1382
    %v1384 = vpop.f32.mrb[0].mxu0
    %1385 = vmatprep.mubr.bf16.mxu0 %v519
    %1386 = vmatmul.mubr.bf16.gmra.mrb[0].mxu0 %v518
    %v1387 = vpop.f32.mrb[0].mxu0
    %v1388 = vadd.f32 %v1291, %v1387
    %v1389 = vpop.f32.mrb[0].mxu0
    %v1390 = vpop.f32.mrb[0].mxu0
    %v1391 = vadd.f32 %v1294, %v1390
    %v1392 = vpop.f32.mrb[0].mxu0
    %1393 = vmatprep.mubr.bf16.mxu0 %v529
    %1394 = vmatmul.mubr.bf16.gmra.mrb[0].mxu0 %v528
    %v1395 = vpop.f32.mrb[0].mxu0
    %v1396 = vadd.f32 %v1299, %v1395
    %v1397 = vpop.f32.mrb[0].mxu0
    %v1398 = vpop.f32.mrb[0].mxu0
    %v1399 = vadd.f32 %v1302, %v1398
    %v1400 = vpop.f32.mrb[0].mxu0
    %1401 = vmatprep.mubr.bf16.mxu0 %v539
    %1402 = vmatmul.mubr.bf16.gmra.mrb[0].mxu0 %v538
    %v1403 = vpop.f32.mrb[0].mxu0
    %v1404 = vadd.f32 %v1307, %v1403
    %v1405 = vpop.f32.mrb[0].mxu0
    %v1406 = vpop.f32.mrb[0].mxu0
    %v1407 = vadd.f32 %v1310, %v1406
    %v1408 = vpop.f32.mrb[0].mxu0
    %1409 = vdwg.mxu0
    %1410 = vmatprep.subr.bf16.mxu0 0
    %1411 = vmatpush1.bf16.msra.mxu0 %v926
    %1412 = vmatprep.subr.bf16.mxu0 0
    %1413 = vmatpush1.bf16.msra.mxu0 %v927
    %1414 = vmatprep.subr.bf16.mxu0 0
    %1415 = vmatpush1.bf16.msra.mxu0 %v928
    %1416 = vmatprep.subr.bf16.mxu0 0
    %1417 = vmatpush1.bf16.msra.mxu0 %v929
    %1418 = vmatprep.subr.bf16.mxu0 0
    %1419 = vmatpush1.bf16.msra.mxu0 %v930
    %1420 = vmatprep.subr.bf16.mxu0 0
    %1421 = vmatpush1.bf16.msra.mxu0 %v931
    %1422 = vmatprep.subr.bf16.mxu0 0
    %1423 = vmatpush1.bf16.msra.mxu0 %v932
    %1424 = vmatprep.subr.bf16.mxu0 0
    %1425 = vmatpush1.bf16.msra.mxu0 %v933
    %1426 = vmatprep.subr.bf16.mxu0 0
    %1427 = vmatpush1.bf16.msra.mxu0 %v934
    %1428 = vmatprep.subr.bf16.mxu0 0
    %1429 = vmatpush1.bf16.msra.mxu0 %v935
    %1430 = vmatprep.subr.bf16.mxu0 0
    %1431 = vmatpush1.bf16.msra.mxu0 %v936
    %1432 = vmatprep.subr.bf16.mxu0 0
    %1433 = vmatpush1.bf16.msra.mxu0 %v937
    %1434 = vmatprep.subr.bf16.mxu0 0
    %1435 = vmatpush1.bf16.msra.mxu0 %v938
    %1436 = vmatprep.subr.bf16.mxu0 0
    %1437 = vmatpush1.bf16.msra.mxu0 %v939
    %1438 = vmatprep.subr.bf16.mxu0 0
    %1439 = vmatpush1.bf16.msra.mxu0 %v940
    %1440 = vmatprep.subr.bf16.mxu0 0
    %1441 = vmatpush1.bf16.msra.mxu0 %v941
    %1442 = vmatprep.mubr.bf16.mxu0 %v471
    %1443 = vmatmul.mubr.bf16.gmra.mrb[0].mxu0 %v470
    %v1444 = vpop.f32.mrb[0].mxu0
    %v1445 = vadd.f32 %v1348, %v1444
    %v1446 = vpop.f32.mrb[0].mxu0
    %v1447 = vpop.f32.mrb[0].mxu0
    %v1448 = vadd.f32 %v1351, %v1447
    %v1449 = vpop.f32.mrb[0].mxu0
    %1450 = vmatprep.mubr.bf16.mxu0 %v481
    %1451 = vmatmul.mubr.bf16.gmra.mrb[0].mxu0 %v480
    %v1452 = vpop.f32.mrb[0].mxu0
    %v1453 = vadd.f32 %v1356, %v1452
    %v1454 = vpop.f32.mrb[0].mxu0
    %v1455 = vpop.f32.mrb[0].mxu0
    %v1456 = vadd.f32 %v1359, %v1455
    %v1457 = vpop.f32.mrb[0].mxu0
    %1458 = vmatprep.mubr.bf16.mxu0 %v491
    %1459 = vmatmul.mubr.bf16.gmra.mrb[0].mxu0 %v490
    %v1460 = vpop.f32.mrb[0].mxu0
    %v1461 = vadd.f32 %v1364, %v1460
    %v1462 = vpop.f32.mrb[0].mxu0
    %v1463 = vpop.f32.mrb[0].mxu0
    %v1464 = vadd.f32 %v1367, %v1463
    %v1465 = vpop.f32.mrb[0].mxu0
    %1466 = vmatprep.mubr.bf16.mxu0 %v501
    %1467 = vmatmul.mubr.bf16.gmra.mrb[0].mxu0 %v500
    %v1468 = vpop.f32.mrb[0].mxu0
    %v1469 = vadd.f32 %v1372, %v1468
    %v1470 = vpop.f32.mrb[0].mxu0
    %v1471 = vpop.f32.mrb[0].mxu0
    %v1472 = vadd.f32 %v1375, %v1471
    %v1473 = vpop.f32.mrb[0].mxu0
    %1474 = vmatprep.mubr.bf16.mxu0 %v511
    %1475 = vmatmul.mubr.bf16.gmra.mrb[0].mxu0 %v510
    %v1476 = vpop.f32.mrb[0].mxu0
    %v1477 = vadd.f32 %v1380, %v1476
    %v1478 = vpop.f32.mrb[0].mxu0
    %v1479 = vpop.f32.mrb[0].mxu0
    %v1480 = vadd.f32 %v1383, %v1479
    %v1481 = vpop.f32.mrb[0].mxu0
    %1482 = vmatprep.mubr.bf16.mxu0 %v521
    %1483 = vmatmul.mubr.bf16.gmra.mrb[0].mxu0 %v520
    %v1484 = vpop.f32.mrb[0].mxu0
    %v1485 = vadd.f32 %v1388, %v1484
    %v1486 = vpop.f32.mrb[0].mxu0
    %v1487 = vpop.f32.mrb[0].mxu0
    %v1488 = vadd.f32 %v1391, %v1487
    %v1489 = vpop.f32.mrb[0].mxu0
    %1490 = vmatprep.mubr.bf16.mxu0 %v531
    %1491 = vmatmul.mubr.bf16.gmra.mrb[0].mxu0 %v530
    %v1492 = vpop.f32.mrb[0].mxu0
    %v1493 = vadd.f32 %v1396, %v1492
    %v1494 = vpop.f32.mrb[0].mxu0
    %v1495 = vpop.f32.mrb[0].mxu0
    %v1496 = vadd.f32 %v1399, %v1495
    %v1497 = vpop.f32.mrb[0].mxu0
    %1498 = vmatprep.mubr.bf16.mxu0 %v541
    %1499 = vmatmul.mubr.bf16.gmra.mrb[0].mxu0 %v540
    %v1500 = vpop.f32.mrb[0].mxu0
    %v1501 = vadd.f32 %v1404, %v1500
    %v1502 = vpop.f32.mrb[0].mxu0
    %v1503 = vpop.f32.mrb[0].mxu0
    %v1504 = vadd.f32 %v1407, %v1503
    %v1505 = vpop.f32.mrb[0].mxu0
    %1506 = vdwg.mxu0
    %v1507 = vpack.c.bf16 %v1448, %v1445
    %v1508 = vpack.c.bf16 %v1456, %v1453
    %v1509 = vpack.c.bf16 %v1464, %v1461
    %v1510 = vpack.c.bf16 %v1472, %v1469
    %v1511 = vpack.c.bf16 %v1480, %v1477
    %v1512 = vpack.c.bf16 %v1488, %v1485
    %v1513 = vpack.c.bf16 %v1496, %v1493
    %v1514 = vpack.c.bf16 %v1504, %v1501
    %v1517 = vlaneseq
    %v1518 = vshrl.u32 %v1517, 7
    %v1519 = vsub.s32 0, %v1518
    %v1520 = vrot.slane %v300, %v1519
    %v1521 = vlaneseq
    %v1522 = vshrl.u32 %v1521, 7
    %v1523 = vsub.s32 1, %v1522
    %v1524 = vrot.slane %v300, %v1523
    %v1525 = vlaneseq
    %v1526 = vshrl.u32 %v1525, 7
    %v1527 = vsub.s32 2, %v1526
    %v1528 = vrot.slane %v300, %v1527
    %v1529 = vlaneseq
    %v1530 = vshrl.u32 %v1529, 7
    %v1531 = vsub.s32 3, %v1530
    %v1532 = vrot.slane %v300, %v1531
    %v1533 = vlaneseq
    %v1534 = vshrl.u32 %v1533, 7
    %v1535 = vsub.s32 4, %v1534
    %v1536 = vrot.slane %v300, %v1535
    %v1537 = vlaneseq
    %v1538 = vshrl.u32 %v1537, 7
    %v1539 = vsub.s32 5, %v1538
    %v1540 = vrot.slane %v300, %v1539
    %v1541 = vlaneseq
    %v1542 = vshrl.u32 %v1541, 7
    %v1543 = vsub.s32 6, %v1542
    %v1544 = vrot.slane %v300, %v1543
    %v1545 = vlaneseq
    %v1546 = vshrl.u32 %v1545, 7
    %v1547 = vsub.s32 7, %v1546
    %v1548 = vrot.slane %v300, %v1547
    %v1549 = vlaneseq
    %v1550 = vshrl.u32 %v1549, 7
    %v1551 = vsub.s32 0, %v1550
    %v1552 = vrot.slane %v301, %v1551
    %v1553 = vlaneseq
    %v1554 = vshrl.u32 %v1553, 7
    %v1555 = vsub.s32 1, %v1554
    %v1556 = vrot.slane %v301, %v1555
    %v1647 = vunpack.c.l.b16 %v220
    %v1648 = vunpack.c.h.b16 %v220
    %v1649 = vunpack.c.l.b16 %v221
    %v1650 = vunpack.c.h.b16 %v221
    %v1651 = vunpack.c.l.b16 %v222
    %v1652 = vunpack.c.h.b16 %v222
    %v1653 = vunpack.c.l.b16 %v223
    %v1654 = vunpack.c.h.b16 %v223
    %v1655 = vunpack.c.l.b16 %v224
    %v1656 = vunpack.c.h.b16 %v224
    %v1657 = vunpack.c.l.b16 %v225
    %v1658 = vunpack.c.h.b16 %v225
    %v1659 = vunpack.c.l.b16 %v226
    %v1660 = vunpack.c.h.b16 %v226
    %v1661 = vunpack.c.l.b16 %v227
    %v1662 = vunpack.c.h.b16 %v227
    %v1663 = vunpack.c.l.b16 %v228
    %v1664 = vunpack.c.h.b16 %v228
    %v1665 = vunpack.c.l.b16 %v229
    %v1666 = vunpack.c.h.b16 %v229
    %v1667 = vunpack.c.l.b16 %v230
    %v1668 = vunpack.c.h.b16 %v230
    %v1669 = vunpack.c.l.b16 %v231
    %v1670 = vunpack.c.h.b16 %v231
    %v1671 = vunpack.c.l.b16 %v232
    %v1672 = vunpack.c.h.b16 %v232
    %v1673 = vunpack.c.l.b16 %v233
    %v1674 = vunpack.c.h.b16 %v233
    %v1675 = vunpack.c.l.b16 %v234
    %v1676 = vunpack.c.h.b16 %v234
    %v1677 = vunpack.c.l.b16 %v235
    %v1678 = vunpack.c.h.b16 %v235
    %v1679 = vunpack.c.l.b16 %v236
    %v1680 = vunpack.c.h.b16 %v236
    %v1681 = vunpack.c.l.b16 %v237
    %v1682 = vunpack.c.h.b16 %v237
    %v1683 = vunpack.c.l.b16 %v238
    %v1684 = vunpack.c.h.b16 %v238
    %v1685 = vunpack.c.l.b16 %v239
    %v1686 = vunpack.c.h.b16 %v239
    %v1687 = vunpack.c.l.b16 %v240
    %v1688 = vunpack.c.h.b16 %v240
    %v1689 = vunpack.c.l.b16 %v241
    %v1690 = vunpack.c.h.b16 %v241
    %v1691 = vunpack.c.l.b16 %v242
    %v1692 = vunpack.c.h.b16 %v242
    %v1693 = vunpack.c.l.b16 %v243
    %v1694 = vunpack.c.h.b16 %v243
    %v1695 = vunpack.c.l.b16 %v244
    %v1696 = vunpack.c.h.b16 %v244
    %v1697 = vunpack.c.l.b16 %v245
    %v1698 = vunpack.c.h.b16 %v245
    %v1699 = vunpack.c.l.b16 %v246
    %v1700 = vunpack.c.h.b16 %v246
    %v1701 = vunpack.c.l.b16 %v247
    %v1702 = vunpack.c.h.b16 %v247
    %v1703 = vunpack.c.l.b16 %v248
    %v1704 = vunpack.c.h.b16 %v248
    %v1705 = vunpack.c.l.b16 %v249
    %v1706 = vunpack.c.h.b16 %v249
    %v1707 = vunpack.c.l.b16 %v250
    %v1708 = vunpack.c.h.b16 %v250
    %v1709 = vunpack.c.l.b16 %v251
    %v1710 = vunpack.c.h.b16 %v251
    %v1711 = vunpack.c.l.b16 %v252
    %v1712 = vunpack.c.h.b16 %v252
    %v1713 = vunpack.c.l.b16 %v253
    %v1714 = vunpack.c.h.b16 %v253
    %v1715 = vunpack.c.l.b16 %v254
    %v1716 = vunpack.c.h.b16 %v254
    %v1717 = vunpack.c.l.b16 %v255
    %v1718 = vunpack.c.h.b16 %v255
    %v1719 = vunpack.c.l.b16 %v256
    %v1720 = vunpack.c.h.b16 %v256
    %v1721 = vunpack.c.l.b16 %v257
    %v1722 = vunpack.c.h.b16 %v257
    %v1723 = vunpack.c.l.b16 %v258
    %v1724 = vunpack.c.h.b16 %v258
    %v1725 = vunpack.c.l.b16 %v259
    %v1726 = vunpack.c.h.b16 %v259
    %v1727 = vunpack.c.l.b16 %v260
    %v1728 = vunpack.c.h.b16 %v260
    %v1729 = vunpack.c.l.b16 %v261
    %v1730 = vunpack.c.h.b16 %v261
    %v1731 = vunpack.c.l.b16 %v262
    %v1732 = vunpack.c.h.b16 %v262
    %v1733 = vunpack.c.l.b16 %v263
    %v1734 = vunpack.c.h.b16 %v263
    %v1735 = vunpack.c.l.b16 %v264
    %v1736 = vunpack.c.h.b16 %v264
    %v1737 = vunpack.c.l.b16 %v265
    %v1738 = vunpack.c.h.b16 %v265
    %v1739 = vunpack.c.l.b16 %v266
    %v1740 = vunpack.c.h.b16 %v266
    %v1741 = vunpack.c.l.b16 %v267
    %v1742 = vunpack.c.h.b16 %v267
    %v1743 = vunpack.c.l.b16 %v268
    %v1744 = vunpack.c.h.b16 %v268
    %v1745 = vunpack.c.l.b16 %v269
    %v1746 = vunpack.c.h.b16 %v269
    %v1747 = vunpack.c.l.b16 %v270
    %v1748 = vunpack.c.h.b16 %v270
    %v1749 = vunpack.c.l.b16 %v271
    %v1750 = vunpack.c.h.b16 %v271
    %v1751 = vunpack.c.l.b16 %v272
    %v1752 = vunpack.c.h.b16 %v272
    %v1753 = vunpack.c.l.b16 %v273
    %v1754 = vunpack.c.h.b16 %v273
    %v1755 = vunpack.c.l.b16 %v274
    %v1756 = vunpack.c.h.b16 %v274
    %v1757 = vunpack.c.l.b16 %v275
    %v1758 = vunpack.c.h.b16 %v275
    %v1759 = vunpack.c.l.b16 %v276
    %v1760 = vunpack.c.h.b16 %v276
    %v1761 = vunpack.c.l.b16 %v277
    %v1762 = vunpack.c.h.b16 %v277
    %v1763 = vunpack.c.l.b16 %v278
    %v1764 = vunpack.c.h.b16 %v278
    %v1765 = vunpack.c.l.b16 %v279
    %v1766 = vunpack.c.h.b16 %v279
    %v1767 = vunpack.c.l.b16 %v280
    %v1768 = vunpack.c.h.b16 %v280
    %v1769 = vunpack.c.l.b16 %v281
    %v1770 = vunpack.c.h.b16 %v281
    %v1771 = vunpack.c.l.b16 %v282
    %v1772 = vunpack.c.h.b16 %v282
    %v1773 = vunpack.c.l.b16 %v283
    %v1774 = vunpack.c.h.b16 %v283
    %v1775 = vunpack.c.l.b16 %v284
    %v1776 = vunpack.c.h.b16 %v284
    %v1777 = vunpack.c.l.b16 %v285
    %v1778 = vunpack.c.h.b16 %v285
    %v1779 = vunpack.c.l.b16 %v286
    %v1780 = vunpack.c.h.b16 %v286
    %v1781 = vunpack.c.l.b16 %v287
    %v1782 = vunpack.c.h.b16 %v287
    %v1783 = vunpack.c.l.b16 %v288
    %v1784 = vunpack.c.h.b16 %v288
    %v1785 = vunpack.c.l.b16 %v289
    %v1786 = vunpack.c.h.b16 %v289
    %v1787 = vunpack.c.l.b16 %v290
    %v1788 = vunpack.c.h.b16 %v290
    %v1789 = vunpack.c.l.b16 %v291
    %v1790 = vunpack.c.h.b16 %v291
    %v1791 = vunpack.c.l.b16 %v292
    %v1792 = vunpack.c.h.b16 %v292
    %v1793 = vunpack.c.l.b16 %v293
    %v1794 = vunpack.c.h.b16 %v293
    %v1795 = vunpack.c.l.b16 %v294
    %v1796 = vunpack.c.h.b16 %v294
    %v1797 = vunpack.c.l.b16 %v295
    %v1798 = vunpack.c.h.b16 %v295
    %v1799 = vunpack.c.l.b16 %v296
    %v1800 = vunpack.c.h.b16 %v296
    %v1801 = vunpack.c.l.b16 %v297
    %v1802 = vunpack.c.h.b16 %v297
    %v1803 = vunpack.c.l.b16 %v298
    %v1804 = vunpack.c.h.b16 %v298
    %v1805 = vunpack.c.l.b16 %v299
    %v1806 = vunpack.c.h.b16 %v299
    %v1807 = vpack.c.b16 %v1657, %v1647
    %v1808 = vpack.c.b16 %v1658, %v1648
    %v1809 = vpack.c.b16 %v1659, %v1649
    %v1810 = vpack.c.b16 %v1660, %v1650
    %v1811 = vpack.c.b16 %v1661, %v1651
    %v1812 = vpack.c.b16 %v1662, %v1652
    %v1813 = vpack.c.b16 %v1663, %v1653
    %v1814 = vpack.c.b16 %v1664, %v1654
    %v1815 = vpack.c.b16 %v1665, %v1655
    %v1816 = vpack.c.b16 %v1666, %v1656
    %v1817 = vpack.c.b16 %v1677, %v1667
    %v1818 = vpack.c.b16 %v1678, %v1668
    %v1819 = vpack.c.b16 %v1679, %v1669
    %v1820 = vpack.c.b16 %v1680, %v1670
    %v1821 = vpack.c.b16 %v1681, %v1671
    %v1822 = vpack.c.b16 %v1682, %v1672
    %v1823 = vpack.c.b16 %v1683, %v1673
    %v1824 = vpack.c.b16 %v1684, %v1674
    %v1825 = vpack.c.b16 %v1685, %v1675
    %v1826 = vpack.c.b16 %v1686, %v1676
    %v1827 = vpack.c.b16 %v1697, %v1687
    %v1828 = vpack.c.b16 %v1698, %v1688
    %v1829 = vpack.c.b16 %v1699, %v1689
    %v1830 = vpack.c.b16 %v1700, %v1690
    %v1831 = vpack.c.b16 %v1701, %v1691
    %v1832 = vpack.c.b16 %v1702, %v1692
    %v1833 = vpack.c.b16 %v1703, %v1693
    %v1834 = vpack.c.b16 %v1704, %v1694
    %v1835 = vpack.c.b16 %v1705, %v1695
    %v1836 = vpack.c.b16 %v1706, %v1696
    %v1837 = vpack.c.b16 %v1717, %v1707
    %v1838 = vpack.c.b16 %v1718, %v1708
    %v1839 = vpack.c.b16 %v1719, %v1709
    %v1840 = vpack.c.b16 %v1720, %v1710
    %v1841 = vpack.c.b16 %v1721, %v1711
    %v1842 = vpack.c.b16 %v1722, %v1712
    %v1843 = vpack.c.b16 %v1723, %v1713
    %v1844 = vpack.c.b16 %v1724, %v1714
    %v1845 = vpack.c.b16 %v1725, %v1715
    %v1846 = vpack.c.b16 %v1726, %v1716
    %v1847 = vpack.c.b16 %v1737, %v1727
    %v1848 = vpack.c.b16 %v1738, %v1728
    %v1849 = vpack.c.b16 %v1739, %v1729
    %v1850 = vpack.c.b16 %v1740, %v1730
    %v1851 = vpack.c.b16 %v1741, %v1731
    %v1852 = vpack.c.b16 %v1742, %v1732
    %v1853 = vpack.c.b16 %v1743, %v1733
    %v1854 = vpack.c.b16 %v1744, %v1734
    %v1855 = vpack.c.b16 %v1745, %v1735
    %v1856 = vpack.c.b16 %v1746, %v1736
    %v1857 = vpack.c.b16 %v1757, %v1747
    %v1858 = vpack.c.b16 %v1758, %v1748
    %v1859 = vpack.c.b16 %v1759, %v1749
    %v1860 = vpack.c.b16 %v1760, %v1750
    %v1861 = vpack.c.b16 %v1761, %v1751
    %v1862 = vpack.c.b16 %v1762, %v1752
    %v1863 = vpack.c.b16 %v1763, %v1753
    %v1864 = vpack.c.b16 %v1764, %v1754
    %v1865 = vpack.c.b16 %v1765, %v1755
    %v1866 = vpack.c.b16 %v1766, %v1756
    %v1867 = vpack.c.b16 %v1777, %v1767
    %v1868 = vpack.c.b16 %v1778, %v1768
    %v1869 = vpack.c.b16 %v1779, %v1769
    %v1870 = vpack.c.b16 %v1780, %v1770
    %v1871 = vpack.c.b16 %v1781, %v1771
    %v1872 = vpack.c.b16 %v1782, %v1772
    %v1873 = vpack.c.b16 %v1783, %v1773
    %v1874 = vpack.c.b16 %v1784, %v1774
    %v1875 = vpack.c.b16 %v1785, %v1775
    %v1876 = vpack.c.b16 %v1786, %v1776
    %v1877 = vpack.c.b16 %v1797, %v1787
    %v1878 = vpack.c.b16 %v1798, %v1788
    %v1879 = vpack.c.b16 %v1799, %v1789
    %v1880 = vpack.c.b16 %v1800, %v1790
    %v1881 = vpack.c.b16 %v1801, %v1791
    %v1882 = vpack.c.b16 %v1802, %v1792
    %v1883 = vpack.c.b16 %v1803, %v1793
    %v1884 = vpack.c.b16 %v1804, %v1794
    %v1885 = vpack.c.b16 %v1805, %v1795
    %v1886 = vpack.c.b16 %v1806, %v1796
    %1967 = vmatprep.subr.bf16.mxu0 %v1808
    %1968 = vmatpush1.bf16.msra.mxu0 %v1807
    %1969 = vmatprep.subr.bf16.mxu0 %v1818
    %1970 = vmatpush1.bf16.msra.mxu0 %v1817
    %1971 = vmatprep.subr.bf16.mxu0 %v1828
    %1972 = vmatpush1.bf16.msra.mxu0 %v1827
    %1973 = vmatprep.subr.bf16.mxu0 %v1838
    %1974 = vmatpush1.bf16.msra.mxu0 %v1837
    %1975 = vmatprep.subr.bf16.mxu0 %v1848
    %1976 = vmatpush1.bf16.msra.mxu0 %v1847
    %1977 = vmatprep.subr.bf16.mxu0 %v1858
    %1978 = vmatpush1.bf16.msra.mxu0 %v1857
    %1979 = vmatprep.subr.bf16.mxu0 %v1868
    %1980 = vmatpush1.bf16.msra.mxu0 %v1867
    %1981 = vmatprep.subr.bf16.mxu0 %v1878
    %1982 = vmatpush1.bf16.msra.mxu0 %v1877
    %1983 = vmatprep.subr.bf16.mxu0 0
    %1984 = vmatpush1.bf16.msra.mxu0 0
    %1985 = vmatprep.subr.bf16.mxu0 0
    %1986 = vmatpush1.bf16.msra.mxu0 0
    %1987 = vmatprep.subr.bf16.mxu0 0
    %1988 = vmatpush1.bf16.msra.mxu0 0
    %1989 = vmatprep.subr.bf16.mxu0 0
    %1990 = vmatpush1.bf16.msra.mxu0 0
    %1991 = vmatprep.subr.bf16.mxu0 0
    %1992 = vmatpush1.bf16.msra.mxu0 0
    %1993 = vmatprep.subr.bf16.mxu0 0
    %1994 = vmatpush1.bf16.msra.mxu0 0
    %1995 = vmatprep.subr.bf16.mxu0 0
    %1996 = vmatpush1.bf16.msra.mxu0 0
    %1997 = vmatprep.subr.bf16.mxu0 0
    %1998 = vmatpush1.bf16.msra.mxu0 0
    %1999 = vmatprep.mubr.bf16.mxu0 0
    %2000 = vmatmul.mubr.bf16.gmra.mrb[0].mxu0 %v1507
    %v2001 = vpop.f32.mrb[0].mxu0
    %v2002 = vadd.f32 %v1520, %v2001
    %v2003 = vpop.f32.mrb[0].mxu0
    %v2004 = vadd.f32 %v1524, %v2003
    %v2005 = vpop.f32.mrb[0].mxu0
    %v2006 = vadd.f32 %v1520, %v2005
    %v2007 = vpop.f32.mrb[0].mxu0
    %v2008 = vadd.f32 %v1524, %v2007
    %2009 = vmatprep.mubr.bf16.mxu0 0
    %2010 = vmatmul.mubr.bf16.gmra.mrb[0].mxu0 %v1508
    %v2011 = vpop.f32.mrb[0].mxu0
    %v2012 = vadd.f32 %v1520, %v2011
    %v2013 = vpop.f32.mrb[0].mxu0
    %v2014 = vadd.f32 %v1524, %v2013
    %v2015 = vpop.f32.mrb[0].mxu0
    %v2016 = vadd.f32 %v1520, %v2015
    %v2017 = vpop.f32.mrb[0].mxu0
    %v2018 = vadd.f32 %v1524, %v2017
    %2019 = vmatprep.mubr.bf16.mxu0 0
    %2020 = vmatmul.mubr.bf16.gmra.mrb[0].mxu0 %v1509
    %v2021 = vpop.f32.mrb[0].mxu0
    %v2022 = vadd.f32 %v1520, %v2021
    %v2023 = vpop.f32.mrb[0].mxu0
    %v2024 = vadd.f32 %v1524, %v2023
    %v2025 = vpop.f32.mrb[0].mxu0
    %v2026 = vadd.f32 %v1520, %v2025
    %v2027 = vpop.f32.mrb[0].mxu0
    %v2028 = vadd.f32 %v1524, %v2027
    %2029 = vmatprep.mubr.bf16.mxu0 0
    %2030 = vmatmul.mubr.bf16.gmra.mrb[0].mxu0 %v1510
    %v2031 = vpop.f32.mrb[0].mxu0
    %v2032 = vadd.f32 %v1520, %v2031
    %v2033 = vpop.f32.mrb[0].mxu0
    %v2034 = vadd.f32 %v1524, %v2033
    %v2035 = vpop.f32.mrb[0].mxu0
    %v2036 = vadd.f32 %v1520, %v2035
    %v2037 = vpop.f32.mrb[0].mxu0
    %v2038 = vadd.f32 %v1524, %v2037
    %2039 = vmatprep.mubr.bf16.mxu0 0
    %2040 = vmatmul.mubr.bf16.gmra.mrb[0].mxu0 %v1511
    %v2041 = vpop.f32.mrb[0].mxu0
    %v2042 = vadd.f32 %v1520, %v2041
    %v2043 = vpop.f32.mrb[0].mxu0
    %v2044 = vadd.f32 %v1524, %v2043
    %v2045 = vpop.f32.mrb[0].mxu0
    %v2046 = vadd.f32 %v1520, %v2045
    %v2047 = vpop.f32.mrb[0].mxu0
    %v2048 = vadd.f32 %v1524, %v2047
    %2049 = vmatprep.mubr.bf16.mxu0 0
    %2050 = vmatmul.mubr.bf16.gmra.mrb[0].mxu0 %v1512
    %v2051 = vpop.f32.mrb[0].mxu0
    %v2052 = vadd.f32 %v1520, %v2051
    %v2053 = vpop.f32.mrb[0].mxu0
    %v2054 = vadd.f32 %v1524, %v2053
    %v2055 = vpop.f32.mrb[0].mxu0
    %v2056 = vadd.f32 %v1520, %v2055
    %v2057 = vpop.f32.mrb[0].mxu0
    %v2058 = vadd.f32 %v1524, %v2057
    %2059 = vmatprep.mubr.bf16.mxu0 0
    %2060 = vmatmul.mubr.bf16.gmra.mrb[0].mxu0 %v1513
    %v2061 = vpop.f32.mrb[0].mxu0
    %v2062 = vadd.f32 %v1520, %v2061
    %v2063 = vpop.f32.mrb[0].mxu0
    %v2064 = vadd.f32 %v1524, %v2063
    %v2065 = vpop.f32.mrb[0].mxu0
    %v2066 = vadd.f32 %v1520, %v2065
    %v2067 = vpop.f32.mrb[0].mxu0
    %v2068 = vadd.f32 %v1524, %v2067
    %2069 = vmatprep.mubr.bf16.mxu0 0
    %2070 = vmatmul.mubr.bf16.gmra.mrb[0].mxu0 %v1514
    %v2071 = vpop.f32.mrb[0].mxu0
    %v2072 = vadd.f32 %v1520, %v2071
    %v2073 = vpop.f32.mrb[0].mxu0
    %v2074 = vadd.f32 %v1524, %v2073
    %v2075 = vpop.f32.mrb[0].mxu0
    %v2076 = vadd.f32 %v1520, %v2075
    %v2077 = vpop.f32.mrb[0].mxu0
    %v2078 = vadd.f32 %v1524, %v2077
    %2079 = vdwg.mxu0
    %2080 = vmatprep.subr.bf16.mxu0 %v1810
    %2081 = vmatpush1.bf16.msra.mxu0 %v1809
    %2082 = vmatprep.subr.bf16.mxu0 %v1820
    %2083 = vmatpush1.bf16.msra.mxu0 %v1819
    %2084 = vmatprep.subr.bf16.mxu0 %v1830
    %2085 = vmatpush1.bf16.msra.mxu0 %v1829
    %2086 = vmatprep.subr.bf16.mxu0 %v1840
    %2087 = vmatpush1.bf16.msra.mxu0 %v1839
    %2088 = vmatprep.subr.bf16.mxu0 %v1850
    %2089 = vmatpush1.bf16.msra.mxu0 %v1849
    %2090 = vmatprep.subr.bf16.mxu0 %v1860
    %2091 = vmatpush1.bf16.msra.mxu0 %v1859
    %2092 = vmatprep.subr.bf16.mxu0 %v1870
    %2093 = vmatpush1.bf16.msra.mxu0 %v1869
    %2094 = vmatprep.subr.bf16.mxu0 %v1880
    %2095 = vmatpush1.bf16.msra.mxu0 %v1879
    %2096 = vmatprep.subr.bf16.mxu0 0
    %2097 = vmatpush1.bf16.msra.mxu0 0
    %2098 = vmatprep.subr.bf16.mxu0 0
    %2099 = vmatpush1.bf16.msra.mxu0 0
    %2100 = vmatprep.subr.bf16.mxu0 0
    %2101 = vmatpush1.bf16.msra.mxu0 0
    %2102 = vmatprep.subr.bf16.mxu0 0
    %2103 = vmatpush1.bf16.msra.mxu0 0
    %2104 = vmatprep.subr.bf16.mxu0 0
    %2105 = vmatpush1.bf16.msra.mxu0 0
    %2106 = vmatprep.subr.bf16.mxu0 0
    %2107 = vmatpush1.bf16.msra.mxu0 0
    %2108 = vmatprep.subr.bf16.mxu0 0
    %2109 = vmatpush1.bf16.msra.mxu0 0
    %2110 = vmatprep.subr.bf16.mxu0 0
    %2111 = vmatpush1.bf16.msra.mxu0 0
    %2112 = vmatprep.mubr.bf16.mxu0 0
    %2113 = vmatmul.mubr.bf16.gmra.mrb[0].mxu0 %v1507
    %v2114 = vpop.f32.mrb[0].mxu0
    %v2115 = vadd.f32 %v1528, %v2114
    %v2116 = vpop.f32.mrb[0].mxu0
    %v2117 = vadd.f32 %v1532, %v2116
    %v2118 = vpop.f32.mrb[0].mxu0
    %v2119 = vadd.f32 %v1528, %v2118
    %v2120 = vpop.f32.mrb[0].mxu0
    %v2121 = vadd.f32 %v1532, %v2120
    %2122 = vmatprep.mubr.bf16.mxu0 0
    %2123 = vmatmul.mubr.bf16.gmra.mrb[0].mxu0 %v1508
    %v2124 = vpop.f32.mrb[0].mxu0
    %v2125 = vadd.f32 %v1528, %v2124
    %v2126 = vpop.f32.mrb[0].mxu0
    %v2127 = vadd.f32 %v1532, %v2126
    %v2128 = vpop.f32.mrb[0].mxu0
    %v2129 = vadd.f32 %v1528, %v2128
    %v2130 = vpop.f32.mrb[0].mxu0
    %v2131 = vadd.f32 %v1532, %v2130
    %2132 = vmatprep.mubr.bf16.mxu0 0
    %2133 = vmatmul.mubr.bf16.gmra.mrb[0].mxu0 %v1509
    %v2134 = vpop.f32.mrb[0].mxu0
    %v2135 = vadd.f32 %v1528, %v2134
    %v2136 = vpop.f32.mrb[0].mxu0
    %v2137 = vadd.f32 %v1532, %v2136
    %v2138 = vpop.f32.mrb[0].mxu0
    %v2139 = vadd.f32 %v1528, %v2138
    %v2140 = vpop.f32.mrb[0].mxu0
    %v2141 = vadd.f32 %v1532, %v2140
    %2142 = vmatprep.mubr.bf16.mxu0 0
    %2143 = vmatmul.mubr.bf16.gmra.mrb[0].mxu0 %v1510
    %v2144 = vpop.f32.mrb[0].mxu0
    %v2145 = vadd.f32 %v1528, %v2144
    %v2146 = vpop.f32.mrb[0].mxu0
    %v2147 = vadd.f32 %v1532, %v2146
    %v2148 = vpop.f32.mrb[0].mxu0
    %v2149 = vadd.f32 %v1528, %v2148
    %v2150 = vpop.f32.mrb[0].mxu0
    %v2151 = vadd.f32 %v1532, %v2150
    %2152 = vmatprep.mubr.bf16.mxu0 0
    %2153 = vmatmul.mubr.bf16.gmra.mrb[0].mxu0 %v1511
    %v2154 = vpop.f32.mrb[0].mxu0
    %v2155 = vadd.f32 %v1528, %v2154
    %v2156 = vpop.f32.mrb[0].mxu0
    %v2157 = vadd.f32 %v1532, %v2156
    %v2158 = vpop.f32.mrb[0].mxu0
    %v2159 = vadd.f32 %v1528, %v2158
    %v2160 = vpop.f32.mrb[0].mxu0
    %v2161 = vadd.f32 %v1532, %v2160
    %2162 = vmatprep.mubr.bf16.mxu0 0
    %2163 = vmatmul.mubr.bf16.gmra.mrb[0].mxu0 %v1512
    %v2164 = vpop.f32.mrb[0].mxu0
    %v2165 = vadd.f32 %v1528, %v2164
    %v2166 = vpop.f32.mrb[0].mxu0
    %v2167 = vadd.f32 %v1532, %v2166
    %v2168 = vpop.f32.mrb[0].mxu0
    %v2169 = vadd.f32 %v1528, %v2168
    %v2170 = vpop.f32.mrb[0].mxu0
    %v2171 = vadd.f32 %v1532, %v2170
    %2172 = vmatprep.mubr.bf16.mxu0 0
    %2173 = vmatmul.mubr.bf16.gmra.mrb[0].mxu0 %v1513
    %v2174 = vpop.f32.mrb[0].mxu0
    %v2175 = vadd.f32 %v1528, %v2174
    %v2176 = vpop.f32.mrb[0].mxu0
    %v2177 = vadd.f32 %v1532, %v2176
    %v2178 = vpop.f32.mrb[0].mxu0
    %v2179 = vadd.f32 %v1528, %v2178
    %v2180 = vpop.f32.mrb[0].mxu0
    %v2181 = vadd.f32 %v1532, %v2180
    %2182 = vmatprep.mubr.bf16.mxu0 0
    %2183 = vmatmul.mubr.bf16.gmra.mrb[0].mxu0 %v1514
    %v2184 = vpop.f32.mrb[0].mxu0
    %v2185 = vadd.f32 %v1528, %v2184
    %v2186 = vpop.f32.mrb[0].mxu0
    %v2187 = vadd.f32 %v1532, %v2186
    %v2188 = vpop.f32.mrb[0].mxu0
    %v2189 = vadd.f32 %v1528, %v2188
    %v2190 = vpop.f32.mrb[0].mxu0
    %v2191 = vadd.f32 %v1532, %v2190
    %2192 = vdwg.mxu0
    %2193 = vmatprep.subr.bf16.mxu0 %v1812
    %2194 = vmatpush1.bf16.msra.mxu0 %v1811
    %2195 = vmatprep.subr.bf16.mxu0 %v1822
    %2196 = vmatpush1.bf16.msra.mxu0 %v1821
    %2197 = vmatprep.subr.bf16.mxu0 %v1832
    %2198 = vmatpush1.bf16.msra.mxu0 %v1831
    %2199 = vmatprep.subr.bf16.mxu0 %v1842
    %2200 = vmatpush1.bf16.msra.mxu0 %v1841
    %2201 = vmatprep.subr.bf16.mxu0 %v1852
    %2202 = vmatpush1.bf16.msra.mxu0 %v1851
    %2203 = vmatprep.subr.bf16.mxu0 %v1862
    %2204 = vmatpush1.bf16.msra.mxu0 %v1861
    %2205 = vmatprep.subr.bf16.mxu0 %v1872
    %2206 = vmatpush1.bf16.msra.mxu0 %v1871
    %2207 = vmatprep.subr.bf16.mxu0 %v1882
    %2208 = vmatpush1.bf16.msra.mxu0 %v1881
    %2209 = vmatprep.subr.bf16.mxu0 0
    %2210 = vmatpush1.bf16.msra.mxu0 0
    %2211 = vmatprep.subr.bf16.mxu0 0
    %2212 = vmatpush1.bf16.msra.mxu0 0
    %2213 = vmatprep.subr.bf16.mxu0 0
    %2214 = vmatpush1.bf16.msra.mxu0 0
    %2215 = vmatprep.subr.bf16.mxu0 0
    %2216 = vmatpush1.bf16.msra.mxu0 0
    %2217 = vmatprep.subr.bf16.mxu0 0
    %2218 = vmatpush1.bf16.msra.mxu0 0
    %2219 = vmatprep.subr.bf16.mxu0 0
    %2220 = vmatpush1.bf16.msra.mxu0 0
    %2221 = vmatprep.subr.bf16.mxu0 0
    %2222 = vmatpush1.bf16.msra.mxu0 0
    %2223 = vmatprep.subr.bf16.mxu0 0
    %2224 = vmatpush1.bf16.msra.mxu0 0
    %2225 = vmatprep.mubr.bf16.mxu0 0
    %2226 = vmatmul.mubr.bf16.gmra.mrb[0].mxu0 %v1507
    %v2227 = vpop.f32.mrb[0].mxu0
    %v2228 = vadd.f32 %v1536, %v2227
    %v2229 = vpop.f32.mrb[0].mxu0
    %v2230 = vadd.f32 %v1540, %v2229
    %v2231 = vpop.f32.mrb[0].mxu0
    %v2232 = vadd.f32 %v1536, %v2231
    %v2233 = vpop.f32.mrb[0].mxu0
    %v2234 = vadd.f32 %v1540, %v2233
    %2235 = vmatprep.mubr.bf16.mxu0 0
    %2236 = vmatmul.mubr.bf16.gmra.mrb[0].mxu0 %v1508
    %v2237 = vpop.f32.mrb[0].mxu0
    %v2238 = vadd.f32 %v1536, %v2237
    %v2239 = vpop.f32.mrb[0].mxu0
    %v2240 = vadd.f32 %v1540, %v2239
    %v2241 = vpop.f32.mrb[0].mxu0
    %v2242 = vadd.f32 %v1536, %v2241
    %v2243 = vpop.f32.mrb[0].mxu0
    %v2244 = vadd.f32 %v1540, %v2243
    %2245 = vmatprep.mubr.bf16.mxu0 0
    %2246 = vmatmul.mubr.bf16.gmra.mrb[0].mxu0 %v1509
    %v2247 = vpop.f32.mrb[0].mxu0
    %v2248 = vadd.f32 %v1536, %v2247
    %v2249 = vpop.f32.mrb[0].mxu0
    %v2250 = vadd.f32 %v1540, %v2249
    %v2251 = vpop.f32.mrb[0].mxu0
    %v2252 = vadd.f32 %v1536, %v2251
    %v2253 = vpop.f32.mrb[0].mxu0
    %v2254 = vadd.f32 %v1540, %v2253
    %2255 = vmatprep.mubr.bf16.mxu0 0
    %2256 = vmatmul.mubr.bf16.gmra.mrb[0].mxu0 %v1510
    %v2257 = vpop.f32.mrb[0].mxu0
    %v2258 = vadd.f32 %v1536, %v2257
    %v2259 = vpop.f32.mrb[0].mxu0
    %v2260 = vadd.f32 %v1540, %v2259
    %v2261 = vpop.f32.mrb[0].mxu0
    %v2262 = vadd.f32 %v1536, %v2261
    %v2263 = vpop.f32.mrb[0].mxu0
    %v2264 = vadd.f32 %v1540, %v2263
    %2265 = vmatprep.mubr.bf16.mxu0 0
    %2266 = vmatmul.mubr.bf16.gmra.mrb[0].mxu0 %v1511
    %v2267 = vpop.f32.mrb[0].mxu0
    %v2268 = vadd.f32 %v1536, %v2267
    %v2269 = vpop.f32.mrb[0].mxu0
    %v2270 = vadd.f32 %v1540, %v2269
    %v2271 = vpop.f32.mrb[0].mxu0
    %v2272 = vadd.f32 %v1536, %v2271
    %v2273 = vpop.f32.mrb[0].mxu0
    %v2274 = vadd.f32 %v1540, %v2273
    %2275 = vmatprep.mubr.bf16.mxu0 0
    %2276 = vmatmul.mubr.bf16.gmra.mrb[0].mxu0 %v1512
    %v2277 = vpop.f32.mrb[0].mxu0
    %v2278 = vadd.f32 %v1536, %v2277
    %v2279 = vpop.f32.mrb[0].mxu0
    %v2280 = vadd.f32 %v1540, %v2279
    %v2281 = vpop.f32.mrb[0].mxu0
    %v2282 = vadd.f32 %v1536, %v2281
    %v2283 = vpop.f32.mrb[0].mxu0
    %v2284 = vadd.f32 %v1540, %v2283
    %2285 = vmatprep.mubr.bf16.mxu0 0
    %2286 = vmatmul.mubr.bf16.gmra.mrb[0].mxu0 %v1513
    %v2287 = vpop.f32.mrb[0].mxu0
    %v2288 = vadd.f32 %v1536, %v2287
    %v2289 = vpop.f32.mrb[0].mxu0
    %v2290 = vadd.f32 %v1540, %v2289
    %v2291 = vpop.f32.mrb[0].mxu0
    %v2292 = vadd.f32 %v1536, %v2291
    %v2293 = vpop.f32.mrb[0].mxu0
    %v2294 = vadd.f32 %v1540, %v2293
    %2295 = vmatprep.mubr.bf16.mxu0 0
    %2296 = vmatmul.mubr.bf16.gmra.mrb[0].mxu0 %v1514
    %v2297 = vpop.f32.mrb[0].mxu0
    %v2298 = vadd.f32 %v1536, %v2297
    %v2299 = vpop.f32.mrb[0].mxu0
    %v2300 = vadd.f32 %v1540, %v2299
    %v2301 = vpop.f32.mrb[0].mxu0
    %v2302 = vadd.f32 %v1536, %v2301
    %v2303 = vpop.f32.mrb[0].mxu0
    %v2304 = vadd.f32 %v1540, %v2303
    %2305 = vdwg.mxu0
    %2306 = vmatprep.subr.bf16.mxu0 %v1814
    %2307 = vmatpush1.bf16.msra.mxu0 %v1813
    %2308 = vmatprep.subr.bf16.mxu0 %v1824
    %2309 = vmatpush1.bf16.msra.mxu0 %v1823
    %2310 = vmatprep.subr.bf16.mxu0 %v1834
    %2311 = vmatpush1.bf16.msra.mxu0 %v1833
    %2312 = vmatprep.subr.bf16.mxu0 %v1844
    %2313 = vmatpush1.bf16.msra.mxu0 %v1843
    %2314 = vmatprep.subr.bf16.mxu0 %v1854
    %2315 = vmatpush1.bf16.msra.mxu0 %v1853
    %2316 = vmatprep.subr.bf16.mxu0 %v1864
    %2317 = vmatpush1.bf16.msra.mxu0 %v1863
    %2318 = vmatprep.subr.bf16.mxu0 %v1874
    %2319 = vmatpush1.bf16.msra.mxu0 %v1873
    %2320 = vmatprep.subr.bf16.mxu0 %v1884
    %2321 = vmatpush1.bf16.msra.mxu0 %v1883
    %2322 = vmatprep.subr.bf16.mxu0 0
    %2323 = vmatpush1.bf16.msra.mxu0 0
    %2324 = vmatprep.subr.bf16.mxu0 0
    %2325 = vmatpush1.bf16.msra.mxu0 0
    %2326 = vmatprep.subr.bf16.mxu0 0
    %2327 = vmatpush1.bf16.msra.mxu0 0
    %2328 = vmatprep.subr.bf16.mxu0 0
    %2329 = vmatpush1.bf16.msra.mxu0 0
    %2330 = vmatprep.subr.bf16.mxu0 0
    %2331 = vmatpush1.bf16.msra.mxu0 0
    %2332 = vmatprep.subr.bf16.mxu0 0
    %2333 = vmatpush1.bf16.msra.mxu0 0
    %2334 = vmatprep.subr.bf16.mxu0 0
    %2335 = vmatpush1.bf16.msra.mxu0 0
    %2336 = vmatprep.subr.bf16.mxu0 0
    %2337 = vmatpush1.bf16.msra.mxu0 0
    %2338 = vmatprep.mubr.bf16.mxu0 0
    %2339 = vmatmul.mubr.bf16.gmra.mrb[0].mxu0 %v1507
    %v2340 = vpop.f32.mrb[0].mxu0
    %v2341 = vadd.f32 %v1544, %v2340
    %v2342 = vpop.f32.mrb[0].mxu0
    %v2343 = vadd.f32 %v1548, %v2342
    %v2344 = vpop.f32.mrb[0].mxu0
    %v2345 = vadd.f32 %v1544, %v2344
    %v2346 = vpop.f32.mrb[0].mxu0
    %v2347 = vadd.f32 %v1548, %v2346
    %2348 = vmatprep.mubr.bf16.mxu0 0
    %2349 = vmatmul.mubr.bf16.gmra.mrb[0].mxu0 %v1508
    %v2350 = vpop.f32.mrb[0].mxu0
    %v2351 = vadd.f32 %v1544, %v2350
    %v2352 = vpop.f32.mrb[0].mxu0
    %v2353 = vadd.f32 %v1548, %v2352
    %v2354 = vpop.f32.mrb[0].mxu0
    %v2355 = vadd.f32 %v1544, %v2354
    %v2356 = vpop.f32.mrb[0].mxu0
    %v2357 = vadd.f32 %v1548, %v2356
    %2358 = vmatprep.mubr.bf16.mxu0 0
    %2359 = vmatmul.mubr.bf16.gmra.mrb[0].mxu0 %v1509
    %v2360 = vpop.f32.mrb[0].mxu0
    %v2361 = vadd.f32 %v1544, %v2360
    %v2362 = vpop.f32.mrb[0].mxu0
    %v2363 = vadd.f32 %v1548, %v2362
    %v2364 = vpop.f32.mrb[0].mxu0
    %v2365 = vadd.f32 %v1544, %v2364
    %v2366 = vpop.f32.mrb[0].mxu0
    %v2367 = vadd.f32 %v1548, %v2366
    %2368 = vmatprep.mubr.bf16.mxu0 0
    %2369 = vmatmul.mubr.bf16.gmra.mrb[0].mxu0 %v1510
    %v2370 = vpop.f32.mrb[0].mxu0
    %v2371 = vadd.f32 %v1544, %v2370
    %v2372 = vpop.f32.mrb[0].mxu0
    %v2373 = vadd.f32 %v1548, %v2372
    %v2374 = vpop.f32.mrb[0].mxu0
    %v2375 = vadd.f32 %v1544, %v2374
    %v2376 = vpop.f32.mrb[0].mxu0
    %v2377 = vadd.f32 %v1548, %v2376
    %2378 = vmatprep.mubr.bf16.mxu0 0
    %2379 = vmatmul.mubr.bf16.gmra.mrb[0].mxu0 %v1511
    %v2380 = vpop.f32.mrb[0].mxu0
    %v2381 = vadd.f32 %v1544, %v2380
    %v2382 = vpop.f32.mrb[0].mxu0
    %v2383 = vadd.f32 %v1548, %v2382
    %v2384 = vpop.f32.mrb[0].mxu0
    %v2385 = vadd.f32 %v1544, %v2384
    %v2386 = vpop.f32.mrb[0].mxu0
    %v2387 = vadd.f32 %v1548, %v2386
    %2388 = vmatprep.mubr.bf16.mxu0 0
    %2389 = vmatmul.mubr.bf16.gmra.mrb[0].mxu0 %v1512
    %v2390 = vpop.f32.mrb[0].mxu0
    %v2391 = vadd.f32 %v1544, %v2390
    %v2392 = vpop.f32.mrb[0].mxu0
    %v2393 = vadd.f32 %v1548, %v2392
    %v2394 = vpop.f32.mrb[0].mxu0
    %v2395 = vadd.f32 %v1544, %v2394
    %v2396 = vpop.f32.mrb[0].mxu0
    %v2397 = vadd.f32 %v1548, %v2396
    %2398 = vmatprep.mubr.bf16.mxu0 0
    %2399 = vmatmul.mubr.bf16.gmra.mrb[0].mxu0 %v1513
    %v2400 = vpop.f32.mrb[0].mxu0
    %v2401 = vadd.f32 %v1544, %v2400
    %v2402 = vpop.f32.mrb[0].mxu0
    %v2403 = vadd.f32 %v1548, %v2402
    %v2404 = vpop.f32.mrb[0].mxu0
    %v2405 = vadd.f32 %v1544, %v2404
    %v2406 = vpop.f32.mrb[0].mxu0
    %v2407 = vadd.f32 %v1548, %v2406
    %2408 = vmatprep.mubr.bf16.mxu0 0
    %2409 = vmatmul.mubr.bf16.gmra.mrb[0].mxu0 %v1514
    %v2410 = vpop.f32.mrb[0].mxu0
    %v2411 = vadd.f32 %v1544, %v2410
    %v2412 = vpop.f32.mrb[0].mxu0
    %v2413 = vadd.f32 %v1548, %v2412
    %v2414 = vpop.f32.mrb[0].mxu0
    %v2415 = vadd.f32 %v1544, %v2414
    %v2416 = vpop.f32.mrb[0].mxu0
    %v2417 = vadd.f32 %v1548, %v2416
    %2418 = vdwg.mxu0
    %2419 = vmatprep.subr.bf16.mxu0 %v1816
    %2420 = vmatpush1.bf16.msra.mxu0 %v1815
    %2421 = vmatprep.subr.bf16.mxu0 %v1826
    %2422 = vmatpush1.bf16.msra.mxu0 %v1825
    %2423 = vmatprep.subr.bf16.mxu0 %v1836
    %2424 = vmatpush1.bf16.msra.mxu0 %v1835
    %2425 = vmatprep.subr.bf16.mxu0 %v1846
    %2426 = vmatpush1.bf16.msra.mxu0 %v1845
    %2427 = vmatprep.subr.bf16.mxu0 %v1856
    %2428 = vmatpush1.bf16.msra.mxu0 %v1855
    %2429 = vmatprep.subr.bf16.mxu0 %v1866
    %2430 = vmatpush1.bf16.msra.mxu0 %v1865
    %2431 = vmatprep.subr.bf16.mxu0 %v1876
    %2432 = vmatpush1.bf16.msra.mxu0 %v1875
    %2433 = vmatprep.subr.bf16.mxu0 %v1886
    %2434 = vmatpush1.bf16.msra.mxu0 %v1885
    %2435 = vmatprep.subr.bf16.mxu0 0
    %2436 = vmatpush1.bf16.msra.mxu0 0
    %2437 = vmatprep.subr.bf16.mxu0 0
    %2438 = vmatpush1.bf16.msra.mxu0 0
    %2439 = vmatprep.subr.bf16.mxu0 0
    %2440 = vmatpush1.bf16.msra.mxu0 0
    %2441 = vmatprep.subr.bf16.mxu0 0
    %2442 = vmatpush1.bf16.msra.mxu0 0
    %2443 = vmatprep.subr.bf16.mxu0 0
    %2444 = vmatpush1.bf16.msra.mxu0 0
    %2445 = vmatprep.subr.bf16.mxu0 0
    %2446 = vmatpush1.bf16.msra.mxu0 0
    %2447 = vmatprep.subr.bf16.mxu0 0
    %2448 = vmatpush1.bf16.msra.mxu0 0
    %2449 = vmatprep.subr.bf16.mxu0 0
    %2450 = vmatpush1.bf16.msra.mxu0 0
    %2451 = vmatprep.mubr.bf16.mxu0 0
    %2452 = vmatmul.mubr.bf16.gmra.mrb[0].mxu0 %v1507
    %v2453 = vpop.f32.mrb[0].mxu0
    %v2454 = vadd.f32 %v1552, %v2453
    %v2455 = vpop.f32.mrb[0].mxu0
    %v2456 = vadd.f32 %v1556, %v2455
    %v2457 = vpop.f32.mrb[0].mxu0
    %v2458 = vadd.f32 %v1552, %v2457
    %v2459 = vpop.f32.mrb[0].mxu0
    %v2460 = vadd.f32 %v1556, %v2459
    %2461 = vmatprep.mubr.bf16.mxu0 0
    %2462 = vmatmul.mubr.bf16.gmra.mrb[0].mxu0 %v1508
    %v2463 = vpop.f32.mrb[0].mxu0
    %v2464 = vadd.f32 %v1552, %v2463
    %v2465 = vpop.f32.mrb[0].mxu0
    %v2466 = vadd.f32 %v1556, %v2465
    %v2467 = vpop.f32.mrb[0].mxu0
    %v2468 = vadd.f32 %v1552, %v2467
    %v2469 = vpop.f32.mrb[0].mxu0
    %v2470 = vadd.f32 %v1556, %v2469
    %2471 = vmatprep.mubr.bf16.mxu0 0
    %2472 = vmatmul.mubr.bf16.gmra.mrb[0].mxu0 %v1509
    %v2473 = vpop.f32.mrb[0].mxu0
    %v2474 = vadd.f32 %v1552, %v2473
    %v2475 = vpop.f32.mrb[0].mxu0
    %v2476 = vadd.f32 %v1556, %v2475
    %v2477 = vpop.f32.mrb[0].mxu0
    %v2478 = vadd.f32 %v1552, %v2477
    %v2479 = vpop.f32.mrb[0].mxu0
    %v2480 = vadd.f32 %v1556, %v2479
    %2481 = vmatprep.mubr.bf16.mxu0 0
    %2482 = vmatmul.mubr.bf16.gmra.mrb[0].mxu0 %v1510
    %v2483 = vpop.f32.mrb[0].mxu0
    %v2484 = vadd.f32 %v1552, %v2483
    %v2485 = vpop.f32.mrb[0].mxu0
    %v2486 = vadd.f32 %v1556, %v2485
    %v2487 = vpop.f32.mrb[0].mxu0
    %v2488 = vadd.f32 %v1552, %v2487
    %v2489 = vpop.f32.mrb[0].mxu0
    %v2490 = vadd.f32 %v1556, %v2489
    %2491 = vmatprep.mubr.bf16.mxu0 0
    %2492 = vmatmul.mubr.bf16.gmra.mrb[0].mxu0 %v1511
    %v2493 = vpop.f32.mrb[0].mxu0
    %v2494 = vadd.f32 %v1552, %v2493
    %v2495 = vpop.f32.mrb[0].mxu0
    %v2496 = vadd.f32 %v1556, %v2495
    %v2497 = vpop.f32.mrb[0].mxu0
    %v2498 = vadd.f32 %v1552, %v2497
    %v2499 = vpop.f32.mrb[0].mxu0
    %v2500 = vadd.f32 %v1556, %v2499
    %2501 = vmatprep.mubr.bf16.mxu0 0
    %2502 = vmatmul.mubr.bf16.gmra.mrb[0].mxu0 %v1512
    %v2503 = vpop.f32.mrb[0].mxu0
    %v2504 = vadd.f32 %v1552, %v2503
    %v2505 = vpop.f32.mrb[0].mxu0
    %v2506 = vadd.f32 %v1556, %v2505
    %v2507 = vpop.f32.mrb[0].mxu0
    %v2508 = vadd.f32 %v1552, %v2507
    %v2509 = vpop.f32.mrb[0].mxu0
    %v2510 = vadd.f32 %v1556, %v2509
    %2511 = vmatprep.mubr.bf16.mxu0 0
    %2512 = vmatmul.mubr.bf16.gmra.mrb[0].mxu0 %v1513
    %v2513 = vpop.f32.mrb[0].mxu0
    %v2514 = vadd.f32 %v1552, %v2513
    %v2515 = vpop.f32.mrb[0].mxu0
    %v2516 = vadd.f32 %v1556, %v2515
    %v2517 = vpop.f32.mrb[0].mxu0
    %v2518 = vadd.f32 %v1552, %v2517
    %v2519 = vpop.f32.mrb[0].mxu0
    %v2520 = vadd.f32 %v1556, %v2519
    %2521 = vmatprep.mubr.bf16.mxu0 0
    %2522 = vmatmul.mubr.bf16.gmra.mrb[0].mxu0 %v1514
    %v2523 = vpop.f32.mrb[0].mxu0
    %v2524 = vadd.f32 %v1552, %v2523
    %v2525 = vpop.f32.mrb[0].mxu0
    %v2526 = vadd.f32 %v1556, %v2525
    %v2527 = vpop.f32.mrb[0].mxu0
    %v2528 = vadd.f32 %v1552, %v2527
    %v2529 = vpop.f32.mrb[0].mxu0
    %v2530 = vadd.f32 %v1556, %v2529
    %2531 = vdwg.mxu0
    %2532 = vst [vmem:[#allocation8] sm:$0xff] %v2002
    %2533 = vst [vmem:[#allocation8 + $0x8] sm:$0xff] %v2004
    %2534 = vst [vmem:[#allocation8 + $0x10] sm:$0xff] %v2115
    %2535 = vst [vmem:[#allocation8 + $0x18] sm:$0xff] %v2117
    %2536 = vst [vmem:[#allocation8 + $0x20] sm:$0xff] %v2228
    %2537 = vst [vmem:[#allocation8 + $0x28] sm:$0xff] %v2230
    %2538 = vst [vmem:[#allocation8 + $0x30] sm:$0xff] %v2341
    %2539 = vst [vmem:[#allocation8 + $0x38] sm:$0xff] %v2343
    %2540 = vst [vmem:[#allocation8 + $0x40] sm:$0xff] %v2454
    %2541 = vst [vmem:[#allocation8 + $0x48] sm:$0xff] %v2456
    %2542 = vst [vmem:[#allocation8 + $0x50] sm:$0xff] %v2006
    %2543 = vst [vmem:[#allocation8 + $0x58] sm:$0xff] %v2008
    %2544 = vst [vmem:[#allocation8 + $0x60] sm:$0xff] %v2119
    %2545 = vst [vmem:[#allocation8 + $0x68] sm:$0xff] %v2121
    %2546 = vst [vmem:[#allocation8 + $0x70] sm:$0xff] %v2232
    %2547 = vst [vmem:[#allocation8 + $0x78] sm:$0xff] %v2234
    %2548 = vst [vmem:[#allocation8 + $0x80] sm:$0xff] %v2345
    %2549 = vst [vmem:[#allocation8 + $0x88] sm:$0xff] %v2347
    %2550 = vst [vmem:[#allocation8 + $0x90] sm:$0xff] %v2458
    %2551 = vst [vmem:[#allocation8 + $0x98] sm:$0xff] %v2460
    %2552 = vst [vmem:[#allocation8 + $0xa0] sm:$0xff] %v2012
    %2553 = vst [vmem:[#allocation8 + $0xa8] sm:$0xff] %v2014
    %2554 = vst [vmem:[#allocation8 + $0xb0] sm:$0xff] %v2125
    %2555 = vst [vmem:[#allocation8 + $0xb8] sm:$0xff] %v2127
    %2556 = vst [vmem:[#allocation8 + $0xc0] sm:$0xff] %v2238
    %2557 = vst [vmem:[#allocation8 + $0xc8] sm:$0xff] %v2240
    %2558 = vst [vmem:[#allocation8 + $0xd0] sm:$0xff] %v2351
    %2559 = vst [vmem:[#allocation8 + $0xd8] sm:$0xff] %v2353
    %2560 = vst [vmem:[#allocation8 + $0xe0] sm:$0xff] %v2464
    %2561 = vst [vmem:[#allocation8 + $0xe8] sm:$0xff] %v2466
    %2562 = vst [vmem:[#allocation8 + $0xf0] sm:$0xff] %v2016
    %2563 = vst [vmem:[#allocation8 + $0xf8] sm:$0xff] %v2018
    %2564 = vst [vmem:[#allocation8 + $0x100] sm:$0xff] %v2129
    %2565 = vst [vmem:[#allocation8 + $0x108] sm:$0xff] %v2131
    %2566 = vst [vmem:[#allocation8 + $0x110] sm:$0xff] %v2242
    %2567 = vst [vmem:[#allocation8 + $0x118] sm:$0xff] %v2244
    %2568 = vst [vmem:[#allocation8 + $0x120] sm:$0xff] %v2355
    %2569 = vst [vmem:[#allocation8 + $0x128] sm:$0xff] %v2357
    %2570 = vst [vmem:[#allocation8 + $0x130] sm:$0xff] %v2468
    %2571 = vst [vmem:[#allocation8 + $0x138] sm:$0xff] %v2470
    %2572 = vst [vmem:[#allocation8 + $0x140] sm:$0xff] %v2022
    %2573 = vst [vmem:[#allocation8 + $0x148] sm:$0xff] %v2024
    %2574 = vst [vmem:[#allocation8 + $0x150] sm:$0xff] %v2135
    %2575 = vst [vmem:[#allocation8 + $0x158] sm:$0xff] %v2137
    %2576 = vst [vmem:[#allocation8 + $0x160] sm:$0xff] %v2248
    %2577 = vst [vmem:[#allocation8 + $0x168] sm:$0xff] %v2250
    %2578 = vst [vmem:[#allocation8 + $0x170] sm:$0xff] %v2361
    %2579 = vst [vmem:[#allocation8 + $0x178] sm:$0xff] %v2363
    %2580 = vst [vmem:[#allocation8 + $0x180] sm:$0xff] %v2474
    %2581 = vst [vmem:[#allocation8 + $0x188] sm:$0xff] %v2476
    %2582 = vst [vmem:[#allocation8 + $0x190] sm:$0xff] %v2026
    %2583 = vst [vmem:[#allocation8 + $0x198] sm:$0xff] %v2028
    %2584 = vst [vmem:[#allocation8 + $0x1a0] sm:$0xff] %v2139
    %2585 = vst [vmem:[#allocation8 + $0x1a8] sm:$0xff] %v2141
    %2586 = vst [vmem:[#allocation8 + $0x1b0] sm:$0xff] %v2252
    %2587 = vst [vmem:[#allocation8 + $0x1b8] sm:$0xff] %v2254
    %2588 = vst [vmem:[#allocation8 + $0x1c0] sm:$0xff] %v2365
    %2589 = vst [vmem:[#allocation8 + $0x1c8] sm:$0xff] %v2367
    %2590 = vst [vmem:[#allocation8 + $0x1d0] sm:$0xff] %v2478
    %2591 = vst [vmem:[#allocation8 + $0x1d8] sm:$0xff] %v2480
    %2592 = vst [vmem:[#allocation8 + $0x1e0] sm:$0xff] %v2032
    %2593 = vst [vmem:[#allocation8 + $0x1e8] sm:$0xff] %v2034
    %2594 = vst [vmem:[#allocation8 + $0x1f0] sm:$0xff] %v2145
    %2595 = vst [vmem:[#allocation8 + $0x1f8] sm:$0xff] %v2147
    %2596 = vst [vmem:[#allocation8 + $0x200] sm:$0xff] %v2258
    %2597 = vst [vmem:[#allocation8 + $0x208] sm:$0xff] %v2260
    %2598 = vst [vmem:[#allocation8 + $0x210] sm:$0xff] %v2371
    %2599 = vst [vmem:[#allocation8 + $0x218] sm:$0xff] %v2373
    %2600 = vst [vmem:[#allocation8 + $0x220] sm:$0xff] %v2484
    %2601 = vst [vmem:[#allocation8 + $0x228] sm:$0xff] %v2486
    %2602 = vst [vmem:[#allocation8 + $0x230] sm:$0xff] %v2036
    %2603 = vst [vmem:[#allocation8 + $0x238] sm:$0xff] %v2038
    %2604 = vst [vmem:[#allocation8 + $0x240] sm:$0xff] %v2149
    %2605 = vst [vmem:[#allocation8 + $0x248] sm:$0xff] %v2151
    %2606 = vst [vmem:[#allocation8 + $0x250] sm:$0xff] %v2262
    %2607 = vst [vmem:[#allocation8 + $0x258] sm:$0xff] %v2264
    %2608 = vst [vmem:[#allocation8 + $0x260] sm:$0xff] %v2375
    %2609 = vst [vmem:[#allocation8 + $0x268] sm:$0xff] %v2377
    %2610 = vst [vmem:[#allocation8 + $0x270] sm:$0xff] %v2488
    %2611 = vst [vmem:[#allocation8 + $0x278] sm:$0xff] %v2490
    %2612 = vst [vmem:[#allocation8 + $0x280] sm:$0xff] %v2042
    %2613 = vst [vmem:[#allocation8 + $0x288] sm:$0xff] %v2044
    %2614 = vst [vmem:[#allocation8 + $0x290] sm:$0xff] %v2155
    %2615 = vst [vmem:[#allocation8 + $0x298] sm:$0xff] %v2157
    %2616 = vst [vmem:[#allocation8 + $0x2a0] sm:$0xff] %v2268
    %2617 = vst [vmem:[#allocation8 + $0x2a8] sm:$0xff] %v2270
    %2618 = vst [vmem:[#allocation8 + $0x2b0] sm:$0xff] %v2381
    %2619 = vst [vmem:[#allocation8 + $0x2b8] sm:$0xff] %v2383
    %2620 = vst [vmem:[#allocation8 + $0x2c0] sm:$0xff] %v2494
    %2621 = vst [vmem:[#allocation8 + $0x2c8] sm:$0xff] %v2496
    %2622 = vst [vmem:[#allocation8 + $0x2d0] sm:$0xff] %v2046
    %2623 = vst [vmem:[#allocation8 + $0x2d8] sm:$0xff] %v2048
    %2624 = vst [vmem:[#allocation8 + $0x2e0] sm:$0xff] %v2159
    %2625 = vst [vmem:[#allocation8 + $0x2e8] sm:$0xff] %v2161
    %2626 = vst [vmem:[#allocation8 + $0x2f0] sm:$0xff] %v2272
    %2627 = vst [vmem:[#allocation8 + $0x2f8] sm:$0xff] %v2274
    %2628 = vst [vmem:[#allocation8 + $0x300] sm:$0xff] %v2385
    %2629 = vst [vmem:[#allocation8 + $0x308] sm:$0xff] %v2387
    %2630 = vst [vmem:[#allocation8 + $0x310] sm:$0xff] %v2498
    %2631 = vst [vmem:[#allocation8 + $0x318] sm:$0xff] %v2500
    %2632 = vst [vmem:[#allocation8 + $0x320] sm:$0xff] %v2052
    %2633 = vst [vmem:[#allocation8 + $0x328] sm:$0xff] %v2054
    %2634 = vst [vmem:[#allocation8 + $0x330] sm:$0xff] %v2165
    %2635 = vst [vmem:[#allocation8 + $0x338] sm:$0xff] %v2167
    %2636 = vst [vmem:[#allocation8 + $0x340] sm:$0xff] %v2278
    %2637 = vst [vmem:[#allocation8 + $0x348] sm:$0xff] %v2280
    %2638 = vst [vmem:[#allocation8 + $0x350] sm:$0xff] %v2391
    %2639 = vst [vmem:[#allocation8 + $0x358] sm:$0xff] %v2393
    %2640 = vst [vmem:[#allocation8 + $0x360] sm:$0xff] %v2504
    %2641 = vst [vmem:[#allocation8 + $0x368] sm:$0xff] %v2506
    %2642 = vst [vmem:[#allocation8 + $0x370] sm:$0xff] %v2056
    %2643 = vst [vmem:[#allocation8 + $0x378] sm:$0xff] %v2058
    %2644 = vst [vmem:[#allocation8 + $0x380] sm:$0xff] %v2169
    %2645 = vst [vmem:[#allocation8 + $0x388] sm:$0xff] %v2171
    %2646 = vst [vmem:[#allocation8 + $0x390] sm:$0xff] %v2282
    %2647 = vst [vmem:[#allocation8 + $0x398] sm:$0xff] %v2284
    %2648 = vst [vmem:[#allocation8 + $0x3a0] sm:$0xff] %v2395
    %2649 = vst [vmem:[#allocation8 + $0x3a8] sm:$0xff] %v2397
    %2650 = vst [vmem:[#allocation8 + $0x3b0] sm:$0xff] %v2508
    %2651 = vst [vmem:[#allocation8 + $0x3b8] sm:$0xff] %v2510
    %2652 = vst [vmem:[#allocation8 + $0x3c0] sm:$0xff] %v2062
    %2653 = vst [vmem:[#allocation8 + $0x3c8] sm:$0xff] %v2064
    %2654 = vst [vmem:[#allocation8 + $0x3d0] sm:$0xff] %v2175
    %2655 = vst [vmem:[#allocation8 + $0x3d8] sm:$0xff] %v2177
    %2656 = vst [vmem:[#allocation8 + $0x3e0] sm:$0xff] %v2288
    %2657 = vst [vmem:[#allocation8 + $0x3e8] sm:$0xff] %v2290
    %2658 = vst [vmem:[#allocation8 + $0x3f0] sm:$0xff] %v2401
    %2659 = vst [vmem:[#allocation8 + $0x3f8] sm:$0xff] %v2403
    %2660 = vst [vmem:[#allocation8 + $0x400] sm:$0xff] %v2514
    %2661 = vst [vmem:[#allocation8 + $0x408] sm:$0xff] %v2516
    %2662 = vst [vmem:[#allocation8 + $0x410] sm:$0xff] %v2066
    %2663 = vst [vmem:[#allocation8 + $0x418] sm:$0xff] %v2068
    %2664 = vst [vmem:[#allocation8 + $0x420] sm:$0xff] %v2179
    %2665 = vst [vmem:[#allocation8 + $0x428] sm:$0xff] %v2181
    %2666 = vst [vmem:[#allocation8 + $0x430] sm:$0xff] %v2292
    %2667 = vst [vmem:[#allocation8 + $0x438] sm:$0xff] %v2294
    %2668 = vst [vmem:[#allocation8 + $0x440] sm:$0xff] %v2405
    %2669 = vst [vmem:[#allocation8 + $0x448] sm:$0xff] %v2407
    %2670 = vst [vmem:[#allocation8 + $0x450] sm:$0xff] %v2518
    %2671 = vst [vmem:[#allocation8 + $0x458] sm:$0xff] %v2520
    %2672 = vst [vmem:[#allocation8 + $0x460] sm:$0xff] %v2072
    %2673 = vst [vmem:[#allocation8 + $0x468] sm:$0xff] %v2074
    %2674 = vst [vmem:[#allocation8 + $0x470] sm:$0xff] %v2185
    %2675 = vst [vmem:[#allocation8 + $0x478] sm:$0xff] %v2187
    %2676 = vst [vmem:[#allocation8 + $0x480] sm:$0xff] %v2298
    %2677 = vst [vmem:[#allocation8 + $0x488] sm:$0xff] %v2300
    %2678 = vst [vmem:[#allocation8 + $0x490] sm:$0xff] %v2411
    %2679 = vst [vmem:[#allocation8 + $0x498] sm:$0xff] %v2413
    %2680 = vst [vmem:[#allocation8 + $0x4a0] sm:$0xff] %v2524
    %2681 = vst [vmem:[#allocation8 + $0x4a8] sm:$0xff] %v2526
    %2682 = vst [vmem:[#allocation8 + $0x4b0] sm:$0xff] %v2076
    %2683 = vst [vmem:[#allocation8 + $0x4b8] sm:$0xff] %v2078
    %2684 = vst [vmem:[#allocation8 + $0x4c0] sm:$0xff] %v2189
    %2685 = vst [vmem:[#allocation8 + $0x4c8] sm:$0xff] %v2191
    %2686 = vst [vmem:[#allocation8 + $0x4d0] sm:$0xff] %v2302
    %2687 = vst [vmem:[#allocation8 + $0x4d8] sm:$0xff] %v2304
    %2688 = vst [vmem:[#allocation8 + $0x4e0] sm:$0xff] %v2415
    %2689 = vst [vmem:[#allocation8 + $0x4e8] sm:$0xff] %v2417
    %2690 = vst [vmem:[#allocation8 + $0x4f0] sm:$0xff] %v2528
    %2691 = vst [vmem:[#allocation8 + $0x4f8] sm:$0xff] %v2530
    // Predicated region
    $region30: #{tpu_custom_call.1} parent=1 // pred_check
      _
    $region31: #{tpu_custom_call.1} parent=1 // pred_check_branch
      %2693 = sbr.rel (0) target = $region33
    $region32: #{tpu_custom_call.1} parent=1 // pred_region
      %s2695 = ssub.s32 20480, 20480
      %2696 = vsyncadd [#allocation4], %s2695
      %s2697 = sshll.u32 [#allocation8], 4
      %s2698 = int_to_ptr.vmem [resolvable:$true] %s2697
      %2703 = dma.vmem_to_hbm [thread:$0]  %s2698, 20480, %s4, [#allocation4], 1280, 1280, 80
    $region33: #{tpu_custom_call.1} parent=1 // pred_fallthru
      _
    // Predicated region
    $region34: #{tpu_custom_call.1} parent=1 // pred_check
      _
    $region35: #{tpu_custom_call.1} parent=1 // pred_check_branch
      %2705 = sbr.rel (0) target = $region37
    $region36: #{tpu_custom_call.1} parent=1 // pred_region
      %2706 = dma.done [#allocation4], 20480
    $region37: #{tpu_custom_call.1} parent=1 // pred_fallthru
      _
    %2707 = vsyncpa [#allocation3], 1
    %2708 = vsyncpa [#allocation6], 1
    %2709 = vsyncpa [#allocation4], 1

</llo_original>
